<compile_context>
chip_gen: v5e
topology: v5e:2x2
jax: 0.10.0
libtpu: 0.0.40
codegen_flags: <defaults>
</compile_context>

<pallas_src>
import numpy as np
import jax
import jax.numpy as jnp
from jax.experimental import pallas as pl
from jax.experimental.pallas import tpu as pltpu

# ---------------- configuration (small synthetic shapes) ----------------
N = 2          # batch
C_IN = 4       # in_channels
C_OUT = 8      # out_channels
H = W = 16     # spatial
SIZES = (1, 2, 3, 6)
NUM_STAGES = len(SIZES)
HW = H * W
C_STAGE = NUM_STAGES * C_OUT                 # 32 stacked pyramid output channels
C_TOTAL = C_IN + C_STAGE                     # 36 concat output channels
PAD_ID = 8                                   # identity branch padded to 8 sublanes
C_PAD = PAD_ID + C_STAGE                     # 40 padded output channels / image
S_TOTAL = sum(s * s for s in SIZES)          # 50 pooled cells across all stages
SPAD = 64                                    # padded pooled-cell axis
S_OFFSETS = np.cumsum([0] + [s * s for s in SIZES])[:-1]   # [0, 1, 5, 14]
EPS = 1e-5                                   # BatchNorm eps


# ---------------- constant linear operators (pool / upsample / mask) ----------------
def adaptive_pool_matrix(out_size, in_size):
    """(out_size, in_size) averaging matrix matching nn.AdaptiveAvgPool (1-D)."""
    m = np.zeros((out_size, in_size), np.float32)
    for i in range(out_size):
        start = (i * in_size) // out_size
        end = -((-(i + 1) * in_size) // out_size)  # ceil((i+1)*in/out)
        m[i, start:end] = 1.0 / (end - start)
    return m


def bilinear_matrix(out_size, in_size):
    """(out_size, in_size) 1-D bilinear interp matrix, align_corners=True."""
    a = np.zeros((out_size, in_size), np.float32)
    if in_size == 1:
        a[:, 0] = 1.0
        return a
    for o in range(out_size):
        src = o * (in_size - 1) / (out_size - 1) if out_size > 1 else 0.0
        i0 = min(int(np.floor(src)), in_size - 1)
        i1 = min(i0 + 1, in_size - 1)
        wgt = src - i0
        a[o, i0] += 1.0 - wgt
        a[o, i1] += wgt
    return a


def build_fused_operators():
    """P_all (HW, SPAD) pre-transposed pooling; U_all (SPAD, HW) stacked upsampling."""
    p_all = np.zeros((HW, SPAD), np.float32)
    u_all = np.zeros((SPAD, HW), np.float32)
    for k, s in enumerate(SIZES):
        off = int(S_OFFSETS[k])
        ph = adaptive_pool_matrix(s, H)
        pw = adaptive_pool_matrix(s, W)
        p_all[:, off:off + s * s] = np.kron(ph, pw).T          # (HW, s*s)
        ay = bilinear_matrix(H, s)
        ax = bilinear_matrix(W, s)
        u_all[off:off + s * s, :] = np.kron(ay, ax).T           # (s*s, HW)
    return p_all, u_all


def build_mask_and_bias(bias_all):
    """Block-diagonal 0/1 mask (C_STAGE, SPAD) and pre-masked bias (C_STAGE, SPAD)."""
    mask = np.zeros((C_STAGE, SPAD), np.float32)
    for k, s in enumerate(SIZES):
        off = int(S_OFFSETS[k])
        mask[k * C_OUT:(k + 1) * C_OUT, off:off + s * s] = 1.0
    bmask = mask * bias_all[:, None]
    return mask, bmask


def build_block_diag_weight(w_all, nb):
    """Stack the BN-folded conv weight block-diagonally for nb batch elements."""
    wb = np.zeros((nb * C_STAGE, nb * C_IN), np.float32)
    for b in range(nb):
        wb[b * C_STAGE:(b + 1) * C_STAGE, b * C_IN:(b + 1) * C_IN] = w_all
    return wb


# ---------------- chip-dependent batching choice ----------------
def pick_batch_block(n):
    """Batch elements per grid step.

    v7x has 2 TensorCores per chip -> one batch element per grid step keeps both
    cores busy via dimension_semantics=("parallel",).  Single-TC v5e/v6e -> the
    grid is a serial loop, so stack the whole batch into one step (M dimension).
    """
    try:
        kind = jax.devices()[0].device_kind.lower()
    except Exception:
        kind = ""
    two_core = "7" in kind          # e.g. "TPU v7x" / "TPU7x"
    return 1 if (two_core and n > 1) else n


# ---------------- Pallas kernel ----------------
def make_psp_kernel(nb):
    def psp_kernel(x_ref, p_ref, w_ref, mask_ref, bmask_ref, u_ref, o_ref):
        # x_ref    : (nb*C_IN, HW)        stacked batch block, spatial flattened
        # p_ref    : (HW, SPAD)           fused pooling operator (pre-transposed)
        # w_ref    : (nb*C_STAGE, nb*C_IN) block-diag BN-folded 1x1 conv weights
        # mask_ref : (nb*C_STAGE, SPAD)   block-diagonal 0/1 stage mask
        # bmask_ref: (nb*C_STAGE, SPAD)   mask * folded bias
        # u_ref    : (SPAD, HW)           fused bilinear upsample operator
        # o_ref    : (nb*C_PAD, HW)       padded (sublane-aligned) output block
        x = x_ref[...]

        # adaptive avg pool of all pyramid levels (all batch rows) in one matmul
        pooled = jnp.dot(x, p_ref[...],
                         preferred_element_type=jnp.float32,
                         precision=jax.lax.Precision.HIGHEST)      # (nb*C_IN, SPAD)
        # all stages' 1x1 conv (BN folded, block-diag over batch) in one matmul
        # (K = nb*C_IN is tiny; could move to VPU MACs if MXU latency binds — measure first)
        conv = jnp.dot(w_ref[...], pooled,
                       preferred_element_type=jnp.float32,
                       precision=jax.lax.Precision.HIGHEST)        # (nb*C_STAGE, SPAD)
        # masked bias + ReLU; mask zeroes cross-stage and padded columns
        y = jnp.maximum(conv * mask_ref[...] + bmask_ref[...], 0.0)
        # bilinear upsample of all stages in one matmul
        up = jnp.dot(y, u_ref[...],
                     preferred_element_type=jnp.float32,
                     precision=jax.lax.Precision.HIGHEST)          # (nb*C_STAGE, HW)

        # Sublane-aligned stores: per image, identity at rows [0, C_IN), dead-zero
        # rows [C_IN, 8), pyramid block at rows [8, 40) (offset multiple of 8 ->
        # unmasked 32x256 store, the dominant write in the kernel).
        for b in range(nb):
            r0 = b * C_PAD
            o_ref[r0:r0 + C_IN, :] = x[b * C_IN:(b + 1) * C_IN, :]
            o_ref[r0 + C_IN:r0 + PAD_ID, :] = jnp.zeros(
                (PAD_ID - C_IN, HW), o_ref.dtype)
            o_ref[r0 + PAD_ID:r0 + PAD_ID + C_STAGE, :] = (
                up[b * C_STAGE:(b + 1) * C_STAGE, :].astype(o_ref.dtype))

    return psp_kernel


def psp_forward(feats, p_all, w_blk, mask_blk, bmask_blk, u_all, nb):
    """feats: (N, C_IN, H, W) float32 -> (N, C_TOTAL, H, W) float32."""
    n, c_in, h, w = feats.shape
    hw = h * w
    assert n % nb == 0
    g = n // nb
    # Row-major reshape stacks nb consecutive batch elements along the M axis.
    x = feats.reshape(g, nb * c_in, hw)

    grid_spec = pltpu.PrefetchScalarGridSpec(
        num_scalar_prefetch=0,
        grid=(g,),
        in_specs=[
            pl.BlockSpec((None, nb * c_in, hw), lambda i: (i, 0, 0)),
            # Constant operands: index maps never change, so Pallas keeps them
            # resident in VMEM across grid steps (<200 KB total).
            pl.BlockSpec((hw, SPAD), lambda i: (0, 0)),
            pl.BlockSpec((nb * C_STAGE, nb * c_in), lambda i: (0, 0)),
            pl.BlockSpec((nb * C_STAGE, SPAD), lambda i: (0, 0)),
            pl.BlockSpec((nb * C_STAGE, SPAD), lambda i: (0, 0)),
            pl.BlockSpec((SPAD, hw), lambda i: (0, 0)),
        ],
        out_specs=pl.BlockSpec((None, nb * C_PAD, hw), lambda i: (i, 0, 0)),
    )

    out = pl.pallas_call(
        make_psp_kernel(nb),
        out_shape=jax.ShapeDtypeStruct((g, nb * C_PAD, hw), jnp.float32),
        grid_spec=grid_spec,
        compiler_params=pltpu.CompilerParams(
            dimension_semantics=("parallel",)),
    )(x, p_all, w_blk, mask_blk, bmask_blk, u_all)

    # Drop the dead alignment rows [C_IN, PAD_ID) and restore (N, C_TOTAL, H, W).
    out = out.reshape(n, C_PAD, hw)
    out = jnp.concatenate(
        [out[:, :C_IN, :], out[:, PAD_ID:PAD_ID + C_STAGE, :]], axis=1)
    return out.reshape(n, C_TOTAL, h, w)


# ---------------- pure numpy reference (PyTorch semantics, eval-mode BN) ----------------
def reference_forward(feats_np, raw_params):
    n, c_in, h, w = feats_np.shape
    priors = [feats_np]
    for k, s in enumerate(SIZES):
        w_conv, gamma, beta, mean, var = raw_params[k]
        pooled = np.zeros((n, c_in, s, s), np.float32)
        for i in range(s):
            h0 = (i * h) // s
            h1 = -((-(i + 1) * h) // s)
            for j in range(s):
                w0 = (j * w) // s
                w1 = -((-(j + 1) * w) // s)
                pooled[:, :, i, j] = feats_np[:, :, h0:h1, w0:w1].mean(axis=(2, 3))
        y = np.einsum('oc,ncij->noij', w_conv, pooled)
        y = (gamma[None, :, None, None] * (y - mean[None, :, None, None])
             / np.sqrt(var[None, :, None, None] + EPS) + beta[None, :, None, None])
        y = np.maximum(y, 0.0)
        ay = bilinear_matrix(h, s)
        ax = bilinear_matrix(w, s)
        up = np.einsum('hi,wj,noij->nohw', ay, ax, y).astype(np.float32)
        priors.append(up)
    return np.concatenate(priors, axis=1)


# ---------------- deterministic parameter init ----------------
def init_params(key):
    raw_params = []
    w_all = np.zeros((C_STAGE, C_IN), np.float32)
    bias_all = np.zeros((C_STAGE,), np.float32)
    keys = jax.random.split(key, NUM_STAGES * 5).reshape(NUM_STAGES, 5, 2)
    for k in range(NUM_STAGES):
        w_conv = np.asarray(
            jax.random.normal(keys[k, 0], (C_OUT, C_IN), jnp.float32)) / np.sqrt(C_IN)
        gamma = np.asarray(
            jax.random.uniform(keys[k, 1], (C_OUT,), jnp.float32, 0.5, 1.5))
        beta = np.asarray(
            jax.random.normal(keys[k, 2], (C_OUT,), jnp.float32)) * 0.1
        mean = np.asarray(
            jax.random.normal(keys[k, 3], (C_OUT,), jnp.float32)) * 0.1
        var = np.asarray(
            jax.random.uniform(keys[k, 4], (C_OUT,), jnp.float32, 0.5, 1.5))
        raw_params.append((w_conv, gamma, beta, mean, var))
        # fold eval-mode BatchNorm into the 1x1 conv
        scale = gamma / np.sqrt(var + EPS)
        w_all[k * C_OUT:(k + 1) * C_OUT] = scale[:, None] * w_conv
        bias_all[k * C_OUT:(k + 1) * C_OUT] = beta - mean * scale
    return raw_params, w_all, bias_all


if __name__ == "__main__":
    key = jax.random.PRNGKey(0)
    k_feats, k_params = jax.random.split(key)

    feats = jax.random.normal(k_feats, (N, C_IN, H, W), jnp.float32)
    raw_params, w_all_np, bias_all_np = init_params(k_params)
    p_all_np, u_all_np = build_fused_operators()
    mask_np, bmask_np = build_mask_and_bias(bias_all_np)

    nb = pick_batch_block(N)                       # N on v5e/v6e, 1 on v7x
    w_blk_np = build_block_diag_weight(w_all_np, nb)
    mask_blk_np = np.tile(mask_np, (nb, 1))
    bmask_blk_np = np.tile(bmask_np, (nb, 1))

    out = psp_forward(
        feats,
        jnp.asarray(p_all_np),
        jnp.asarray(w_blk_np),
        jnp.asarray(mask_blk_np),
        jnp.asarray(bmask_blk_np),
        jnp.asarray(u_all_np),
        nb,
    )
    out = jax.block_until_ready(out)

    ref = reference_forward(np.asarray(feats), raw_params)
    assert out.shape == (N, C_TOTAL, H, W), out.shape
    # precision=HIGHEST restored -> tight tolerance (per correctness review)
    if not np.allclose(np.asarray(out), ref, rtol=1e-4, atol=1e-4):
        max_err = np.max(np.abs(np.asarray(out) - ref))
        raise AssertionError(f"mismatch vs reference, max abs err = {max_err}")

    print("KERNEL_OK")
</pallas_src>

<mosaic_0001>
module attributes {stable_mosaic.version = 11 : i64} {
  func.func @psp_kernel(%arg0: i32, %arg1: memref<1x8x256xf32, #tpu.memory_space<vmem>>, %arg2: memref<256x64xf32, #tpu.memory_space<vmem>>, %arg3: memref<64x8xf32, #tpu.memory_space<vmem>>, %arg4: memref<64x64xf32, #tpu.memory_space<vmem>>, %arg5: memref<64x64xf32, #tpu.memory_space<vmem>>, %arg6: memref<64x256xf32, #tpu.memory_space<vmem>>, %arg7: memref<1x80x256xf32, #tpu.memory_space<vmem>>) attributes {dimension_semantics = [#tpu.dimension_semantics<parallel>], iteration_bounds = array<i64: 1>, scalar_prefetch = 0 : i64, scratch_operands = 0 : i64, tpu.core_type = #tpu.core_type<tc>, window_params = [{transform_indices = @transform_0, window_bounds = array<i64: 1, 8, 256>}, {pipeline_mode = #tpu.pipeline_mode<synchronous>, transform_indices = @transform_1, window_bounds = array<i64: 256, 64>}, {pipeline_mode = #tpu.pipeline_mode<synchronous>, transform_indices = @transform_2, window_bounds = array<i64: 64, 8>}, {pipeline_mode = #tpu.pipeline_mode<synchronous>, transform_indices = @transform_3, window_bounds = array<i64: 64, 64>}, {pipeline_mode = #tpu.pipeline_mode<synchronous>, transform_indices = @transform_4, window_bounds = array<i64: 64, 64>}, {pipeline_mode = #tpu.pipeline_mode<synchronous>, transform_indices = @transform_5, window_bounds = array<i64: 64, 256>}, {transform_indices = @transform_6, window_bounds = array<i64: 1, 80, 256>}]} {
    %c0 = arith.constant 0 : index
    %c0_0 = arith.constant 0 : index
    %c0_1 = arith.constant 0 : index
    %0 = vector.load %arg1[%c0, %c0_0, %c0_1] : memref<1x8x256xf32, #tpu.memory_space<vmem>>, vector<1x8x256xf32>
    %1 = vector.shape_cast %0 : vector<1x8x256xf32> to vector<8x256xf32>
    %c0_2 = arith.constant 0 : index
    %c0_3 = arith.constant 0 : index
    %2 = vector.load %arg2[%c0_2, %c0_3] : memref<256x64xf32, #tpu.memory_space<vmem>>, vector<256x64xf32>
    %cst = arith.constant dense<0.000000e+00> : vector<8x64xf32>
    %3 = tpu.matmul %1, %2, %cst {dimension_numbers = #tpu.dot_dimension_numbers<[1], [0], [0], [1], [0, 0, 1, 1], [], []>, precision = #tpu.contract_precision<fp32>} : vector<8x256xf32>, vector<256x64xf32>, vector<8x64xf32> -> vector<8x64xf32>
    %c0_4 = arith.constant 0 : index
    %c0_5 = arith.constant 0 : index
    %4 = vector.load %arg3[%c0_4, %c0_5] : memref<64x8xf32, #tpu.memory_space<vmem>>, vector<64x8xf32>
    %cst_6 = arith.constant dense<0.000000e+00> : vector<64x64xf32>
    %5 = tpu.matmul %4, %3, %cst_6 {dimension_numbers = #tpu.dot_dimension_numbers<[1], [0], [0], [1], [0, 0, 1, 1], [], []>, precision = #tpu.contract_precision<fp32>} : vector<64x8xf32>, vector<8x64xf32>, vector<64x64xf32> -> vector<64x64xf32>
    %c0_7 = arith.constant 0 : index
    %c0_8 = arith.constant 0 : index
    %6 = vector.load %arg4[%c0_7, %c0_8] : memref<64x64xf32, #tpu.memory_space<vmem>>, vector<64x64xf32>
    %7 = arith.mulf %5, %6 : vector<64x64xf32>
    %c0_9 = arith.constant 0 : index
    %c0_10 = arith.constant 0 : index
    %8 = vector.load %arg5[%c0_9, %c0_10] : memref<64x64xf32, #tpu.memory_space<vmem>>, vector<64x64xf32>
    %9 = arith.addf %7, %8 : vector<64x64xf32>
    %cst_11 = arith.constant 0.000000e+00 : f32
    %10 = vector.broadcast %cst_11 : f32 to vector<64x64xf32>
    %11 = arith.maximumf %9, %10 : vector<64x64xf32>
    %c0_12 = arith.constant 0 : index
    %c0_13 = arith.constant 0 : index
    %12 = vector.load %arg6[%c0_12, %c0_13] : memref<64x256xf32, #tpu.memory_space<vmem>>, vector<64x256xf32>
    %cst_14 = arith.constant dense<0.000000e+00> : vector<64x256xf32>
    %13 = tpu.matmul %11, %12, %cst_14 {dimension_numbers = #tpu.dot_dimension_numbers<[1], [0], [0], [1], [0, 0, 1, 1], [], []>, precision = #tpu.contract_precision<fp32>} : vector<64x64xf32>, vector<64x256xf32>, vector<64x256xf32> -> vector<64x256xf32>
    %14 = vector.extract_strided_slice %1 {offsets = [0, 0], sizes = [4, 256], strides = [1, 1]} : vector<8x256xf32> to vector<4x256xf32>
    %c0_15 = arith.constant 0 : index
    %c0_16 = arith.constant 0 : index
    %c0_17 = arith.constant 0 : index
    %15 = vector.load %arg7[%c0_15, %c0_16, %c0_17] : memref<1x80x256xf32, #tpu.memory_space<vmem>>, vector<1x4x256xf32>
    %16 = vector.shape_cast %15 : vector<1x4x256xf32> to vector<4x256xf32>
    %17 = vector.shape_cast %14 : vector<4x256xf32> to vector<1x4x256xf32>
    tpu.vector_store %arg7[%c0_15, %c0_16, %c0_17], %17 {strides = array<i32>} : memref<1x80x256xf32, #tpu.memory_space<vmem>>, vector<1x4x256xf32>,
    %cst_18 = arith.constant 0.000000e+00 : f32
    %18 = vector.broadcast %cst_18 : f32 to vector<4x256xf32>
    %c0_19 = arith.constant 0 : index
    %c4 = arith.constant 4 : index
    %c0_20 = arith.constant 0 : index
    %19 = vector.load %arg7[%c0_19, %c4, %c0_20] : memref<1x80x256xf32, #tpu.memory_space<vmem>>, vector<1x4x256xf32>
    %20 = vector.shape_cast %19 : vector<1x4x256xf32> to vector<4x256xf32>
    %21 = vector.shape_cast %18 : vector<4x256xf32> to vector<1x4x256xf32>
    tpu.vector_store %arg7[%c0_19, %c4, %c0_20], %21 {strides = array<i32>} : memref<1x80x256xf32, #tpu.memory_space<vmem>>, vector<1x4x256xf32>,
    %22 = vector.extract_strided_slice %13 {offsets = [0, 0], sizes = [32, 256], strides = [1, 1]} : vector<64x256xf32> to vector<32x256xf32>
    %c0_21 = arith.constant 0 : index
    %c8 = arith.constant 8 : index
    %c0_22 = arith.constant 0 : index
    %23 = vector.load %arg7[%c0_21, %c8, %c0_22] : memref<1x80x256xf32, #tpu.memory_space<vmem>>, vector<1x32x256xf32>
    %24 = vector.shape_cast %23 : vector<1x32x256xf32> to vector<32x256xf32>
    %25 = vector.shape_cast %22 : vector<32x256xf32> to vector<1x32x256xf32>
    tpu.vector_store %arg7[%c0_21, %c8, %c0_22], %25 {strides = array<i32>} : memref<1x80x256xf32, #tpu.memory_space<vmem>>, vector<1x32x256xf32>,
    %26 = vector.extract_strided_slice %1 {offsets = [4, 0], sizes = [4, 256], strides = [1, 1]} : vector<8x256xf32> to vector<4x256xf32>
    %c0_23 = arith.constant 0 : index
    %c40 = arith.constant 40 : index
    %c0_24 = arith.constant 0 : index
    %27 = vector.load %arg7[%c0_23, %c40, %c0_24] : memref<1x80x256xf32, #tpu.memory_space<vmem>>, vector<1x4x256xf32>
    %28 = vector.shape_cast %27 : vector<1x4x256xf32> to vector<4x256xf32>
    %29 = vector.shape_cast %26 : vector<4x256xf32> to vector<1x4x256xf32>
    tpu.vector_store %arg7[%c0_23, %c40, %c0_24], %29 {strides = array<i32>} : memref<1x80x256xf32, #tpu.memory_space<vmem>>, vector<1x4x256xf32>,
    %cst_25 = arith.constant 0.000000e+00 : f32
    %30 = vector.broadcast %cst_25 : f32 to vector<4x256xf32>
    %c0_26 = arith.constant 0 : index
    %c44 = arith.constant 44 : index
    %c0_27 = arith.constant 0 : index
    %31 = vector.load %arg7[%c0_26, %c44, %c0_27] : memref<1x80x256xf32, #tpu.memory_space<vmem>>, vector<1x4x256xf32>
    %32 = vector.shape_cast %31 : vector<1x4x256xf32> to vector<4x256xf32>
    %33 = vector.shape_cast %30 : vector<4x256xf32> to vector<1x4x256xf32>
    tpu.vector_store %arg7[%c0_26, %c44, %c0_27], %33 {strides = array<i32>} : memref<1x80x256xf32, #tpu.memory_space<vmem>>, vector<1x4x256xf32>,
    %34 = vector.extract_strided_slice %13 {offsets = [32, 0], sizes = [32, 256], strides = [1, 1]} : vector<64x256xf32> to vector<32x256xf32>
    %c0_28 = arith.constant 0 : index
    %c48 = arith.constant 48 : index
    %c0_29 = arith.constant 0 : index
    %35 = vector.load %arg7[%c0_28, %c48, %c0_29] : memref<1x80x256xf32, #tpu.memory_space<vmem>>, vector<1x32x256xf32>
    %36 = vector.shape_cast %35 : vector<1x32x256xf32> to vector<32x256xf32>
    %37 = vector.shape_cast %34 : vector<32x256xf32> to vector<1x32x256xf32>
    tpu.vector_store %arg7[%c0_28, %c48, %c0_29], %37 {strides = array<i32>} : memref<1x80x256xf32, #tpu.memory_space<vmem>>, vector<1x32x256xf32>,
    return
  }
  func.func @transform_0(%arg0: i32) -> (i32, i32, i32) {
    %c0_i32 = arith.constant 0 : i32
    %c0_i32_0 = arith.constant 0 : i32
    %c0_i32_1 = arith.constant 0 : i32
    return %arg0, %c0_i32, %c0_i32_0 : i32, i32, i32
  }
  func.func @transform_1(%arg0: i32) -> (i32, i32) {
    %c0_i32 = arith.constant 0 : i32
    %c0_i32_0 = arith.constant 0 : i32
    %c0_i32_1 = arith.constant 0 : i32
    return %c0_i32, %c0_i32_0 : i32, i32
  }
  func.func @transform_2(%arg0: i32) -> (i32, i32) {
    %c0_i32 = arith.constant 0 : i32
    %c0_i32_0 = arith.constant 0 : i32
    %c0_i32_1 = arith.constant 0 : i32
    return %c0_i32, %c0_i32_0 : i32, i32
  }
  func.func @transform_3(%arg0: i32) -> (i32, i32) {
    %c0_i32 = arith.constant 0 : i32
    %c0_i32_0 = arith.constant 0 : i32
    %c0_i32_1 = arith.constant 0 : i32
    return %c0_i32, %c0_i32_0 : i32, i32
  }
  func.func @transform_4(%arg0: i32) -> (i32, i32) {
    %c0_i32 = arith.constant 0 : i32
    %c0_i32_0 = arith.constant 0 : i32
    %c0_i32_1 = arith.constant 0 : i32
    return %c0_i32, %c0_i32_0 : i32, i32
  }
  func.func @transform_5(%arg0: i32) -> (i32, i32) {
    %c0_i32 = arith.constant 0 : i32
    %c0_i32_0 = arith.constant 0 : i32
    %c0_i32_1 = arith.constant 0 : i32
    return %c0_i32, %c0_i32_0 : i32, i32
  }
  func.func @transform_6(%arg0: i32) -> (i32, i32, i32) {
    %c0_i32 = arith.constant 0 : i32
    %c0_i32_0 = arith.constant 0 : i32
    %c0_i32_1 = arith.constant 0 : i32
    return %arg0, %c0_i32, %c0_i32_0 : i32, i32, i32
  }
}

</mosaic_0001>

<llo_original>
// kernel: tpu_custom_call.1
$region0: #{tpu_custom_call.1}
  #allocation0 [shape = 'u32[]', space=smem, size = 0x4, offset = 0x4, fixed_abs, tag = 'smem constant byte address 0x4 - core index']
  #allocation1 [shape = 'u32[72,128]{1,0:T(1,128)}', space=vmem, size = 0x9000, scoped, tag = 'internal scratch']
  %s0 = inlined_call_operand.vmem [shape: f32[1,8,256], index: 0, kind: input, shape index: {}]
  %s1 = inlined_call_operand.vmem [shape: f32[256,64], index: 1, kind: input, shape index: {}]
  %s2 = inlined_call_operand.vmem [shape: f32[64,8], index: 2, kind: input, shape index: {}]
  %s3 = inlined_call_operand.vmem [shape: f32[64,64], index: 3, kind: input, shape index: {}]
  %s4 = inlined_call_operand.vmem [shape: f32[64,64], index: 4, kind: input, shape index: {}]
  %s5 = inlined_call_operand.vmem [shape: f32[64,256], index: 5, kind: input, shape index: {}]
  %s6 = inlined_call_operand.hbm [shape: f32[1,80,256], index: 6, kind: output, shape index: {}]
  %s7 = sld [smem:[#allocation0]]
  $region34: #{tpu_custom_call.1} parent=0
    _
  %s9 = ssub.s32 1, %s7
  %s10 = scalar_select 0, %s9, %s7
  $region1: #{tpu_custom_call.1} parent=0
    #allocation2 [shape = 'u8[81920]{0}', space=vmem, size = 0x14000, scoped, tag = 'output window, operand 0, single buffered']
    #allocation3 [shape = 's32[1]{0}', space=sflag, size = 0x4, scoped, tag = 'scoped memory for tpu_custom_call.1']
    %11 = vsyncpa [#allocation3], 0
    // Predicated region
    $region2: #{tpu_custom_call.1} parent=1 // pred_check
      _
    $region3: #{tpu_custom_call.1} parent=1 // pred_check_branch
      %13 = sbr.rel (0) target = $region5
    $region4: #{tpu_custom_call.1} parent=1 // pred_region
      _
    $region5: #{tpu_custom_call.1} parent=1 // pred_fallthru
      _
    // Predicated region
    $region6: #{tpu_custom_call.1} parent=1 // pred_check
      _
    $region7: #{tpu_custom_call.1} parent=1 // pred_check_branch
      %15 = sbr.rel (0) target = $region9
    $region8: #{tpu_custom_call.1} parent=1 // pred_region
      _
    $region9: #{tpu_custom_call.1} parent=1 // pred_fallthru
      _
    // Predicated region
    $region10: #{tpu_custom_call.1} parent=1 // pred_check
      _
    $region11: #{tpu_custom_call.1} parent=1 // pred_check_branch
      %17 = sbr.rel (0) target = $region13
    $region12: #{tpu_custom_call.1} parent=1 // pred_region
      _
    $region13: #{tpu_custom_call.1} parent=1 // pred_fallthru
      _
    // Predicated region
    $region14: #{tpu_custom_call.1} parent=1 // pred_check
      _
    $region15: #{tpu_custom_call.1} parent=1 // pred_check_branch
      %19 = sbr.rel (0) target = $region17
    $region16: #{tpu_custom_call.1} parent=1 // pred_region
      _
    $region17: #{tpu_custom_call.1} parent=1 // pred_fallthru
      _
    // Predicated region
    $region18: #{tpu_custom_call.1} parent=1 // pred_check
      _
    $region19: #{tpu_custom_call.1} parent=1 // pred_check_branch
      %21 = sbr.rel (0) target = $region21
    $region20: #{tpu_custom_call.1} parent=1 // pred_region
      _
    $region21: #{tpu_custom_call.1} parent=1 // pred_fallthru
      _
    // Predicated region
    $region22: #{tpu_custom_call.1} parent=1 // pred_check
      _
    $region23: #{tpu_custom_call.1} parent=1 // pred_check_branch
      %23 = sbr.rel (0) target = $region25
    $region24: #{tpu_custom_call.1} parent=1 // pred_region
      _
    $region25: #{tpu_custom_call.1} parent=1 // pred_fallthru
      _
    %v24 = vld [vmem:[%s0] sm:$0xff]
    %v25 = vld [vmem:[%s0 + $0x8] sm:$0xff]
    %v26 = vld [vmem:[%s1] sm:$0xff]
    %v27 = vld [vmem:[%s1 + $0x8] sm:$0xff]
    %v28 = vld [vmem:[%s1 + $0x10] sm:$0xff]
    %v29 = vld [vmem:[%s1 + $0x18] sm:$0xff]
    %v30 = vld [vmem:[%s1 + $0x20] sm:$0xff]
    %v31 = vld [vmem:[%s1 + $0x28] sm:$0xff]
    %v32 = vld [vmem:[%s1 + $0x30] sm:$0xff]
    %v33 = vld [vmem:[%s1 + $0x38] sm:$0xff]
    %v34 = vld [vmem:[%s1 + $0x40] sm:$0xff]
    %v35 = vld [vmem:[%s1 + $0x48] sm:$0xff]
    %v36 = vld [vmem:[%s1 + $0x50] sm:$0xff]
    %v37 = vld [vmem:[%s1 + $0x58] sm:$0xff]
    %v38 = vld [vmem:[%s1 + $0x60] sm:$0xff]
    %v39 = vld [vmem:[%s1 + $0x68] sm:$0xff]
    %v40 = vld [vmem:[%s1 + $0x70] sm:$0xff]
    %v41 = vld [vmem:[%s1 + $0x78] sm:$0xff]
    %v42 = vld [vmem:[%s1 + $0x80] sm:$0xff]
    %v43 = vld [vmem:[%s1 + $0x88] sm:$0xff]
    %v44 = vld [vmem:[%s1 + $0x90] sm:$0xff]
    %v45 = vld [vmem:[%s1 + $0x98] sm:$0xff]
    %v46 = vld [vmem:[%s1 + $0xa0] sm:$0xff]
    %v47 = vld [vmem:[%s1 + $0xa8] sm:$0xff]
    %v48 = vld [vmem:[%s1 + $0xb0] sm:$0xff]
    %v49 = vld [vmem:[%s1 + $0xb8] sm:$0xff]
    %v50 = vld [vmem:[%s1 + $0xc0] sm:$0xff]
    %v51 = vld [vmem:[%s1 + $0xc8] sm:$0xff]
    %v52 = vld [vmem:[%s1 + $0xd0] sm:$0xff]
    %v53 = vld [vmem:[%s1 + $0xd8] sm:$0xff]
    %v54 = vld [vmem:[%s1 + $0xe0] sm:$0xff]
    %v55 = vld [vmem:[%s1 + $0xe8] sm:$0xff]
    %v56 = vld [vmem:[%s1 + $0xf0] sm:$0xff]
    %v57 = vld [vmem:[%s1 + $0xf8] sm:$0xff]
    %v58 = vand.u32 %v41, 4294901760
    %59 = vmatpush.msra.mxu0 %v58
    %v60 = vand.u32 %v40, 4294901760
    %61 = vmatpush.msra.mxu0 %v60
    %v62 = vand.u32 %v39, 4294901760
    %63 = vmatpush.msra.mxu0 %v62
    %v64 = vand.u32 %v38, 4294901760
    %65 = vmatpush.msra.mxu0 %v64
    %v66 = vand.u32 %v37, 4294901760
    %67 = vmatpush.msra.mxu0 %v66
    %v68 = vand.u32 %v36, 4294901760
    %69 = vmatpush.msra.mxu0 %v68
    %v70 = vand.u32 %v35, 4294901760
    %71 = vmatpush.msra.mxu0 %v70
    %v72 = vand.u32 %v34, 4294901760
    %73 = vmatpush.msra.mxu0 %v72
    %v74 = vand.u32 %v33, 4294901760
    %75 = vmatpush.msra.mxu0 %v74
    %v76 = vand.u32 %v32, 4294901760
    %77 = vmatpush.msra.mxu0 %v76
    %v78 = vand.u32 %v31, 4294901760
    %79 = vmatpush.msra.mxu0 %v78
    %v80 = vand.u32 %v30, 4294901760
    %81 = vmatpush.msra.mxu0 %v80
    %v82 = vand.u32 %v29, 4294901760
    %83 = vmatpush.msra.mxu0 %v82
    %v84 = vand.u32 %v28, 4294901760
    %85 = vmatpush.msra.mxu0 %v84
    %v86 = vand.u32 %v27, 4294901760
    %87 = vmatpush.msra.mxu0 %v86
    %v88 = vand.u32 %v26, 4294901760
    %89 = vmatpush.msra.mxu0 %v88
    %v90 = vand.u32 %v24, 4294901760
    %v91 = vsub.f32 %v24, %v90
    %v92 = vand.u32 %v91, 4294901760
    %v93 = vsub.f32 %v91, %v92
    %v94 = vand.u32 %v93, 4294901760
    %95 = vmatmul.f32.gmra.mxu0 %v94
    %v96 = vpop.f32.mrf.mxu0
    %v97 = vadd.f32 0.0, %v96
    %98 = vdwg.mxu0
    %v99 = vand.u32 %v41, 4294901760
    %v100 = vsub.f32 %v41, %v99
    %v101 = vand.u32 %v100, 4294901760
    %v102 = vsub.f32 %v100, %v101
    %v103 = vand.u32 %v102, 4294901760
    %104 = vmatpush.msra.mxu0 %v103
    %v105 = vand.u32 %v40, 4294901760
    %v106 = vsub.f32 %v40, %v105
    %v107 = vand.u32 %v106, 4294901760
    %v108 = vsub.f32 %v106, %v107
    %v109 = vand.u32 %v108, 4294901760
    %110 = vmatpush.msra.mxu0 %v109
    %v111 = vand.u32 %v39, 4294901760
    %v112 = vsub.f32 %v39, %v111
    %v113 = vand.u32 %v112, 4294901760
    %v114 = vsub.f32 %v112, %v113
    %v115 = vand.u32 %v114, 4294901760
    %116 = vmatpush.msra.mxu0 %v115
    %v117 = vand.u32 %v38, 4294901760
    %v118 = vsub.f32 %v38, %v117
    %v119 = vand.u32 %v118, 4294901760
    %v120 = vsub.f32 %v118, %v119
    %v121 = vand.u32 %v120, 4294901760
    %122 = vmatpush.msra.mxu0 %v121
    %v123 = vand.u32 %v37, 4294901760
    %v124 = vsub.f32 %v37, %v123
    %v125 = vand.u32 %v124, 4294901760
    %v126 = vsub.f32 %v124, %v125
    %v127 = vand.u32 %v126, 4294901760
    %128 = vmatpush.msra.mxu0 %v127
    %v129 = vand.u32 %v36, 4294901760
    %v130 = vsub.f32 %v36, %v129
    %v131 = vand.u32 %v130, 4294901760
    %v132 = vsub.f32 %v130, %v131
    %v133 = vand.u32 %v132, 4294901760
    %134 = vmatpush.msra.mxu0 %v133
    %v135 = vand.u32 %v35, 4294901760
    %v136 = vsub.f32 %v35, %v135
    %v137 = vand.u32 %v136, 4294901760
    %v138 = vsub.f32 %v136, %v137
    %v139 = vand.u32 %v138, 4294901760
    %140 = vmatpush.msra.mxu0 %v139
    %v141 = vand.u32 %v34, 4294901760
    %v142 = vsub.f32 %v34, %v141
    %v143 = vand.u32 %v142, 4294901760
    %v144 = vsub.f32 %v142, %v143
    %v145 = vand.u32 %v144, 4294901760
    %146 = vmatpush.msra.mxu0 %v145
    %v147 = vand.u32 %v33, 4294901760
    %v148 = vsub.f32 %v33, %v147
    %v149 = vand.u32 %v148, 4294901760
    %v150 = vsub.f32 %v148, %v149
    %v151 = vand.u32 %v150, 4294901760
    %152 = vmatpush.msra.mxu0 %v151
    %v153 = vand.u32 %v32, 4294901760
    %v154 = vsub.f32 %v32, %v153
    %v155 = vand.u32 %v154, 4294901760
    %v156 = vsub.f32 %v154, %v155
    %v157 = vand.u32 %v156, 4294901760
    %158 = vmatpush.msra.mxu0 %v157
    %v159 = vand.u32 %v31, 4294901760
    %v160 = vsub.f32 %v31, %v159
    %v161 = vand.u32 %v160, 4294901760
    %v162 = vsub.f32 %v160, %v161
    %v163 = vand.u32 %v162, 4294901760
    %164 = vmatpush.msra.mxu0 %v163
    %v165 = vand.u32 %v30, 4294901760
    %v166 = vsub.f32 %v30, %v165
    %v167 = vand.u32 %v166, 4294901760
    %v168 = vsub.f32 %v166, %v167
    %v169 = vand.u32 %v168, 4294901760
    %170 = vmatpush.msra.mxu0 %v169
    %v171 = vand.u32 %v29, 4294901760
    %v172 = vsub.f32 %v29, %v171
    %v173 = vand.u32 %v172, 4294901760
    %v174 = vsub.f32 %v172, %v173
    %v175 = vand.u32 %v174, 4294901760
    %176 = vmatpush.msra.mxu0 %v175
    %v177 = vand.u32 %v28, 4294901760
    %v178 = vsub.f32 %v28, %v177
    %v179 = vand.u32 %v178, 4294901760
    %v180 = vsub.f32 %v178, %v179
    %v181 = vand.u32 %v180, 4294901760
    %182 = vmatpush.msra.mxu0 %v181
    %v183 = vand.u32 %v27, 4294901760
    %v184 = vsub.f32 %v27, %v183
    %v185 = vand.u32 %v184, 4294901760
    %v186 = vsub.f32 %v184, %v185
    %v187 = vand.u32 %v186, 4294901760
    %188 = vmatpush.msra.mxu0 %v187
    %v189 = vand.u32 %v26, 4294901760
    %v190 = vsub.f32 %v26, %v189
    %v191 = vand.u32 %v190, 4294901760
    %v192 = vsub.f32 %v190, %v191
    %v193 = vand.u32 %v192, 4294901760
    %194 = vmatpush.msra.mxu0 %v193
    %v195 = vand.u32 %v24, 4294901760
    %196 = vmatmul.f32.gmra.mxu0 %v195
    %v197 = vpop.f32.mrf.mxu0
    %v198 = vadd.f32 %v97, %v197
    %199 = vdwg.mxu0
    %v200 = vand.u32 %v41, 4294901760
    %v201 = vsub.f32 %v41, %v200
    %202 = vmatpush.msra.mxu0 %v201
    %v203 = vand.u32 %v40, 4294901760
    %v204 = vsub.f32 %v40, %v203
    %205 = vmatpush.msra.mxu0 %v204
    %v206 = vand.u32 %v39, 4294901760
    %v207 = vsub.f32 %v39, %v206
    %208 = vmatpush.msra.mxu0 %v207
    %v209 = vand.u32 %v38, 4294901760
    %v210 = vsub.f32 %v38, %v209
    %211 = vmatpush.msra.mxu0 %v210
    %v212 = vand.u32 %v37, 4294901760
    %v213 = vsub.f32 %v37, %v212
    %214 = vmatpush.msra.mxu0 %v213
    %v215 = vand.u32 %v36, 4294901760
    %v216 = vsub.f32 %v36, %v215
    %217 = vmatpush.msra.mxu0 %v216
    %v218 = vand.u32 %v35, 4294901760
    %v219 = vsub.f32 %v35, %v218
    %220 = vmatpush.msra.mxu0 %v219
    %v221 = vand.u32 %v34, 4294901760
    %v222 = vsub.f32 %v34, %v221
    %223 = vmatpush.msra.mxu0 %v222
    %v224 = vand.u32 %v33, 4294901760
    %v225 = vsub.f32 %v33, %v224
    %226 = vmatpush.msra.mxu0 %v225
    %v227 = vand.u32 %v32, 4294901760
    %v228 = vsub.f32 %v32, %v227
    %229 = vmatpush.msra.mxu0 %v228
    %v230 = vand.u32 %v31, 4294901760
    %v231 = vsub.f32 %v31, %v230
    %232 = vmatpush.msra.mxu0 %v231
    %v233 = vand.u32 %v30, 4294901760
    %v234 = vsub.f32 %v30, %v233
    %235 = vmatpush.msra.mxu0 %v234
    %v236 = vand.u32 %v29, 4294901760
    %v237 = vsub.f32 %v29, %v236
    %238 = vmatpush.msra.mxu0 %v237
    %v239 = vand.u32 %v28, 4294901760
    %v240 = vsub.f32 %v28, %v239
    %241 = vmatpush.msra.mxu0 %v240
    %v242 = vand.u32 %v27, 4294901760
    %v243 = vsub.f32 %v27, %v242
    %244 = vmatpush.msra.mxu0 %v243
    %v245 = vand.u32 %v26, 4294901760
    %v246 = vsub.f32 %v26, %v245
    %247 = vmatpush.msra.mxu0 %v246
    %v248 = vand.u32 %v24, 4294901760
    %v249 = vsub.f32 %v24, %v248
    %250 = vmatmul.f32.gmra.mxu0 %v249
    %v251 = vpop.f32.mrf.mxu0
    %v252 = vadd.f32 %v198, %v251
    %253 = vdwg.mxu0
    %v254 = vand.u32 %v41, 4294901760
    %255 = vmatpush.msra.mxu0 %v254
    %v256 = vand.u32 %v40, 4294901760
    %257 = vmatpush.msra.mxu0 %v256
    %v258 = vand.u32 %v39, 4294901760
    %259 = vmatpush.msra.mxu0 %v258
    %v260 = vand.u32 %v38, 4294901760
    %261 = vmatpush.msra.mxu0 %v260
    %v262 = vand.u32 %v37, 4294901760
    %263 = vmatpush.msra.mxu0 %v262
    %v264 = vand.u32 %v36, 4294901760
    %265 = vmatpush.msra.mxu0 %v264
    %v266 = vand.u32 %v35, 4294901760
    %267 = vmatpush.msra.mxu0 %v266
    %v268 = vand.u32 %v34, 4294901760
    %269 = vmatpush.msra.mxu0 %v268
    %v270 = vand.u32 %v33, 4294901760
    %271 = vmatpush.msra.mxu0 %v270
    %v272 = vand.u32 %v32, 4294901760
    %273 = vmatpush.msra.mxu0 %v272
    %v274 = vand.u32 %v31, 4294901760
    %275 = vmatpush.msra.mxu0 %v274
    %v276 = vand.u32 %v30, 4294901760
    %277 = vmatpush.msra.mxu0 %v276
    %v278 = vand.u32 %v29, 4294901760
    %279 = vmatpush.msra.mxu0 %v278
    %v280 = vand.u32 %v28, 4294901760
    %281 = vmatpush.msra.mxu0 %v280
    %v282 = vand.u32 %v27, 4294901760
    %283 = vmatpush.msra.mxu0 %v282
    %v284 = vand.u32 %v26, 4294901760
    %285 = vmatpush.msra.mxu0 %v284
    %v286 = vand.u32 %v24, 4294901760
    %v287 = vsub.f32 %v24, %v286
    %v288 = vand.u32 %v287, 4294901760
    %289 = vmatmul.f32.gmra.mxu0 %v288
    %v290 = vpop.f32.mrf.mxu0
    %v291 = vadd.f32 %v252, %v290
    %292 = vdwg.mxu0
    %v293 = vand.u32 %v41, 4294901760
    %v294 = vsub.f32 %v41, %v293
    %v295 = vand.u32 %v294, 4294901760
    %296 = vmatpush.msra.mxu0 %v295
    %v297 = vand.u32 %v40, 4294901760
    %v298 = vsub.f32 %v40, %v297
    %v299 = vand.u32 %v298, 4294901760
    %300 = vmatpush.msra.mxu0 %v299
    %v301 = vand.u32 %v39, 4294901760
    %v302 = vsub.f32 %v39, %v301
    %v303 = vand.u32 %v302, 4294901760
    %304 = vmatpush.msra.mxu0 %v303
    %v305 = vand.u32 %v38, 4294901760
    %v306 = vsub.f32 %v38, %v305
    %v307 = vand.u32 %v306, 4294901760
    %308 = vmatpush.msra.mxu0 %v307
    %v309 = vand.u32 %v37, 4294901760
    %v310 = vsub.f32 %v37, %v309
    %v311 = vand.u32 %v310, 4294901760
    %312 = vmatpush.msra.mxu0 %v311
    %v313 = vand.u32 %v36, 4294901760
    %v314 = vsub.f32 %v36, %v313
    %v315 = vand.u32 %v314, 4294901760
    %316 = vmatpush.msra.mxu0 %v315
    %v317 = vand.u32 %v35, 4294901760
    %v318 = vsub.f32 %v35, %v317
    %v319 = vand.u32 %v318, 4294901760
    %320 = vmatpush.msra.mxu0 %v319
    %v321 = vand.u32 %v34, 4294901760
    %v322 = vsub.f32 %v34, %v321
    %v323 = vand.u32 %v322, 4294901760
    %324 = vmatpush.msra.mxu0 %v323
    %v325 = vand.u32 %v33, 4294901760
    %v326 = vsub.f32 %v33, %v325
    %v327 = vand.u32 %v326, 4294901760
    %328 = vmatpush.msra.mxu0 %v327
    %v329 = vand.u32 %v32, 4294901760
    %v330 = vsub.f32 %v32, %v329
    %v331 = vand.u32 %v330, 4294901760
    %332 = vmatpush.msra.mxu0 %v331
    %v333 = vand.u32 %v31, 4294901760
    %v334 = vsub.f32 %v31, %v333
    %v335 = vand.u32 %v334, 4294901760
    %336 = vmatpush.msra.mxu0 %v335
    %v337 = vand.u32 %v30, 4294901760
    %v338 = vsub.f32 %v30, %v337
    %v339 = vand.u32 %v338, 4294901760
    %340 = vmatpush.msra.mxu0 %v339
    %v341 = vand.u32 %v29, 4294901760
    %v342 = vsub.f32 %v29, %v341
    %v343 = vand.u32 %v342, 4294901760
    %344 = vmatpush.msra.mxu0 %v343
    %v345 = vand.u32 %v28, 4294901760
    %v346 = vsub.f32 %v28, %v345
    %v347 = vand.u32 %v346, 4294901760
    %348 = vmatpush.msra.mxu0 %v347
    %v349 = vand.u32 %v27, 4294901760
    %v350 = vsub.f32 %v27, %v349
    %v351 = vand.u32 %v350, 4294901760
    %352 = vmatpush.msra.mxu0 %v351
    %v353 = vand.u32 %v26, 4294901760
    %v354 = vsub.f32 %v26, %v353
    %v355 = vand.u32 %v354, 4294901760
    %356 = vmatpush.msra.mxu0 %v355
    %v357 = vand.u32 %v24, 4294901760
    %358 = vmatmul.f32.gmra.mxu0 %v357
    %v359 = vpop.f32.mrf.mxu0
    %v360 = vadd.f32 %v291, %v359
    %361 = vdwg.mxu0
    %v362 = vand.u32 %v41, 4294901760
    %363 = vmatpush.msra.mxu0 %v362
    %v364 = vand.u32 %v40, 4294901760
    %365 = vmatpush.msra.mxu0 %v364
    %v366 = vand.u32 %v39, 4294901760
    %367 = vmatpush.msra.mxu0 %v366
    %v368 = vand.u32 %v38, 4294901760
    %369 = vmatpush.msra.mxu0 %v368
    %v370 = vand.u32 %v37, 4294901760
    %371 = vmatpush.msra.mxu0 %v370
    %v372 = vand.u32 %v36, 4294901760
    %373 = vmatpush.msra.mxu0 %v372
    %v374 = vand.u32 %v35, 4294901760
    %375 = vmatpush.msra.mxu0 %v374
    %v376 = vand.u32 %v34, 4294901760
    %377 = vmatpush.msra.mxu0 %v376
    %v378 = vand.u32 %v33, 4294901760
    %379 = vmatpush.msra.mxu0 %v378
    %v380 = vand.u32 %v32, 4294901760
    %381 = vmatpush.msra.mxu0 %v380
    %v382 = vand.u32 %v31, 4294901760
    %383 = vmatpush.msra.mxu0 %v382
    %v384 = vand.u32 %v30, 4294901760
    %385 = vmatpush.msra.mxu0 %v384
    %v386 = vand.u32 %v29, 4294901760
    %387 = vmatpush.msra.mxu0 %v386
    %v388 = vand.u32 %v28, 4294901760
    %389 = vmatpush.msra.mxu0 %v388
    %v390 = vand.u32 %v27, 4294901760
    %391 = vmatpush.msra.mxu0 %v390
    %v392 = vand.u32 %v26, 4294901760
    %393 = vmatpush.msra.mxu0 %v392
    %v394 = vand.u32 %v24, 4294901760
    %395 = vmatmul.f32.gmra.mxu0 %v394
    %v396 = vpop.f32.mrf.mxu0
    %v397 = vadd.f32 %v360, %v396
    %398 = vdwg.mxu0
    %v399 = vand.u32 %v57, 4294901760
    %400 = vmatpush.msra.mxu0 %v399
    %v401 = vand.u32 %v56, 4294901760
    %402 = vmatpush.msra.mxu0 %v401
    %v403 = vand.u32 %v55, 4294901760
    %404 = vmatpush.msra.mxu0 %v403
    %v405 = vand.u32 %v54, 4294901760
    %406 = vmatpush.msra.mxu0 %v405
    %v407 = vand.u32 %v53, 4294901760
    %408 = vmatpush.msra.mxu0 %v407
    %v409 = vand.u32 %v52, 4294901760
    %410 = vmatpush.msra.mxu0 %v409
    %v411 = vand.u32 %v51, 4294901760
    %412 = vmatpush.msra.mxu0 %v411
    %v413 = vand.u32 %v50, 4294901760
    %414 = vmatpush.msra.mxu0 %v413
    %v415 = vand.u32 %v49, 4294901760
    %416 = vmatpush.msra.mxu0 %v415
    %v417 = vand.u32 %v48, 4294901760
    %418 = vmatpush.msra.mxu0 %v417
    %v419 = vand.u32 %v47, 4294901760
    %420 = vmatpush.msra.mxu0 %v419
    %v421 = vand.u32 %v46, 4294901760
    %422 = vmatpush.msra.mxu0 %v421
    %v423 = vand.u32 %v45, 4294901760
    %424 = vmatpush.msra.mxu0 %v423
    %v425 = vand.u32 %v44, 4294901760
    %426 = vmatpush.msra.mxu0 %v425
    %v427 = vand.u32 %v43, 4294901760
    %428 = vmatpush.msra.mxu0 %v427
    %v429 = vand.u32 %v42, 4294901760
    %430 = vmatpush.msra.mxu0 %v429
    %v431 = vand.u32 %v25, 4294901760
    %v432 = vsub.f32 %v25, %v431
    %v433 = vand.u32 %v432, 4294901760
    %v434 = vsub.f32 %v432, %v433
    %v435 = vand.u32 %v434, 4294901760
    %436 = vmatmul.f32.gmra.mxu0 %v435
    %v437 = vpop.f32.mrf.mxu0
    %v438 = vadd.f32 %v397, %v437
    %439 = vdwg.mxu0
    %v440 = vand.u32 %v57, 4294901760
    %v441 = vsub.f32 %v57, %v440
    %v442 = vand.u32 %v441, 4294901760
    %v443 = vsub.f32 %v441, %v442
    %v444 = vand.u32 %v443, 4294901760
    %445 = vmatpush.msra.mxu0 %v444
    %v446 = vand.u32 %v56, 4294901760
    %v447 = vsub.f32 %v56, %v446
    %v448 = vand.u32 %v447, 4294901760
    %v449 = vsub.f32 %v447, %v448
    %v450 = vand.u32 %v449, 4294901760
    %451 = vmatpush.msra.mxu0 %v450
    %v452 = vand.u32 %v55, 4294901760
    %v453 = vsub.f32 %v55, %v452
    %v454 = vand.u32 %v453, 4294901760
    %v455 = vsub.f32 %v453, %v454
    %v456 = vand.u32 %v455, 4294901760
    %457 = vmatpush.msra.mxu0 %v456
    %v458 = vand.u32 %v54, 4294901760
    %v459 = vsub.f32 %v54, %v458
    %v460 = vand.u32 %v459, 4294901760
    %v461 = vsub.f32 %v459, %v460
    %v462 = vand.u32 %v461, 4294901760
    %463 = vmatpush.msra.mxu0 %v462
    %v464 = vand.u32 %v53, 4294901760
    %v465 = vsub.f32 %v53, %v464
    %v466 = vand.u32 %v465, 4294901760
    %v467 = vsub.f32 %v465, %v466
    %v468 = vand.u32 %v467, 4294901760
    %469 = vmatpush.msra.mxu0 %v468
    %v470 = vand.u32 %v52, 4294901760
    %v471 = vsub.f32 %v52, %v470
    %v472 = vand.u32 %v471, 4294901760
    %v473 = vsub.f32 %v471, %v472
    %v474 = vand.u32 %v473, 4294901760
    %475 = vmatpush.msra.mxu0 %v474
    %v476 = vand.u32 %v51, 4294901760
    %v477 = vsub.f32 %v51, %v476
    %v478 = vand.u32 %v477, 4294901760
    %v479 = vsub.f32 %v477, %v478
    %v480 = vand.u32 %v479, 4294901760
    %481 = vmatpush.msra.mxu0 %v480
    %v482 = vand.u32 %v50, 4294901760
    %v483 = vsub.f32 %v50, %v482
    %v484 = vand.u32 %v483, 4294901760
    %v485 = vsub.f32 %v483, %v484
    %v486 = vand.u32 %v485, 4294901760
    %487 = vmatpush.msra.mxu0 %v486
    %v488 = vand.u32 %v49, 4294901760
    %v489 = vsub.f32 %v49, %v488
    %v490 = vand.u32 %v489, 4294901760
    %v491 = vsub.f32 %v489, %v490
    %v492 = vand.u32 %v491, 4294901760
    %493 = vmatpush.msra.mxu0 %v492
    %v494 = vand.u32 %v48, 4294901760
    %v495 = vsub.f32 %v48, %v494
    %v496 = vand.u32 %v495, 4294901760
    %v497 = vsub.f32 %v495, %v496
    %v498 = vand.u32 %v497, 4294901760
    %499 = vmatpush.msra.mxu0 %v498
    %v500 = vand.u32 %v47, 4294901760
    %v501 = vsub.f32 %v47, %v500
    %v502 = vand.u32 %v501, 4294901760
    %v503 = vsub.f32 %v501, %v502
    %v504 = vand.u32 %v503, 4294901760
    %505 = vmatpush.msra.mxu0 %v504
    %v506 = vand.u32 %v46, 4294901760
    %v507 = vsub.f32 %v46, %v506
    %v508 = vand.u32 %v507, 4294901760
    %v509 = vsub.f32 %v507, %v508
    %v510 = vand.u32 %v509, 4294901760
    %511 = vmatpush.msra.mxu0 %v510
    %v512 = vand.u32 %v45, 4294901760
    %v513 = vsub.f32 %v45, %v512
    %v514 = vand.u32 %v513, 4294901760
    %v515 = vsub.f32 %v513, %v514
    %v516 = vand.u32 %v515, 4294901760
    %517 = vmatpush.msra.mxu0 %v516
    %v518 = vand.u32 %v44, 4294901760
    %v519 = vsub.f32 %v44, %v518
    %v520 = vand.u32 %v519, 4294901760
    %v521 = vsub.f32 %v519, %v520
    %v522 = vand.u32 %v521, 4294901760
    %523 = vmatpush.msra.mxu0 %v522
    %v524 = vand.u32 %v43, 4294901760
    %v525 = vsub.f32 %v43, %v524
    %v526 = vand.u32 %v525, 4294901760
    %v527 = vsub.f32 %v525, %v526
    %v528 = vand.u32 %v527, 4294901760
    %529 = vmatpush.msra.mxu0 %v528
    %v530 = vand.u32 %v42, 4294901760
    %v531 = vsub.f32 %v42, %v530
    %v532 = vand.u32 %v531, 4294901760
    %v533 = vsub.f32 %v531, %v532
    %v534 = vand.u32 %v533, 4294901760
    %535 = vmatpush.msra.mxu0 %v534
    %v536 = vand.u32 %v25, 4294901760
    %537 = vmatmul.f32.gmra.mxu0 %v536
    %v538 = vpop.f32.mrf.mxu0
    %v539 = vadd.f32 %v438, %v538
    %540 = vdwg.mxu0
    %v541 = vand.u32 %v57, 4294901760
    %v542 = vsub.f32 %v57, %v541
    %543 = vmatpush.msra.mxu0 %v542
    %v544 = vand.u32 %v56, 4294901760
    %v545 = vsub.f32 %v56, %v544
    %546 = vmatpush.msra.mxu0 %v545
    %v547 = vand.u32 %v55, 4294901760
    %v548 = vsub.f32 %v55, %v547
    %549 = vmatpush.msra.mxu0 %v548
    %v550 = vand.u32 %v54, 4294901760
    %v551 = vsub.f32 %v54, %v550
    %552 = vmatpush.msra.mxu0 %v551
    %v553 = vand.u32 %v53, 4294901760
    %v554 = vsub.f32 %v53, %v553
    %555 = vmatpush.msra.mxu0 %v554
    %v556 = vand.u32 %v52, 4294901760
    %v557 = vsub.f32 %v52, %v556
    %558 = vmatpush.msra.mxu0 %v557
    %v559 = vand.u32 %v51, 4294901760
    %v560 = vsub.f32 %v51, %v559
    %561 = vmatpush.msra.mxu0 %v560
    %v562 = vand.u32 %v50, 4294901760
    %v563 = vsub.f32 %v50, %v562
    %564 = vmatpush.msra.mxu0 %v563
    %v565 = vand.u32 %v49, 4294901760
    %v566 = vsub.f32 %v49, %v565
    %567 = vmatpush.msra.mxu0 %v566
    %v568 = vand.u32 %v48, 4294901760
    %v569 = vsub.f32 %v48, %v568
    %570 = vmatpush.msra.mxu0 %v569
    %v571 = vand.u32 %v47, 4294901760
    %v572 = vsub.f32 %v47, %v571
    %573 = vmatpush.msra.mxu0 %v572
    %v574 = vand.u32 %v46, 4294901760
    %v575 = vsub.f32 %v46, %v574
    %576 = vmatpush.msra.mxu0 %v575
    %v577 = vand.u32 %v45, 4294901760
    %v578 = vsub.f32 %v45, %v577
    %579 = vmatpush.msra.mxu0 %v578
    %v580 = vand.u32 %v44, 4294901760
    %v581 = vsub.f32 %v44, %v580
    %582 = vmatpush.msra.mxu0 %v581
    %v583 = vand.u32 %v43, 4294901760
    %v584 = vsub.f32 %v43, %v583
    %585 = vmatpush.msra.mxu0 %v584
    %v586 = vand.u32 %v42, 4294901760
    %v587 = vsub.f32 %v42, %v586
    %588 = vmatpush.msra.mxu0 %v587
    %v589 = vand.u32 %v25, 4294901760
    %v590 = vsub.f32 %v25, %v589
    %591 = vmatmul.f32.gmra.mxu0 %v590
    %v592 = vpop.f32.mrf.mxu0
    %v593 = vadd.f32 %v539, %v592
    %594 = vdwg.mxu0
    %v595 = vand.u32 %v57, 4294901760
    %596 = vmatpush.msra.mxu0 %v595
    %v597 = vand.u32 %v56, 4294901760
    %598 = vmatpush.msra.mxu0 %v597
    %v599 = vand.u32 %v55, 4294901760
    %600 = vmatpush.msra.mxu0 %v599
    %v601 = vand.u32 %v54, 4294901760
    %602 = vmatpush.msra.mxu0 %v601
    %v603 = vand.u32 %v53, 4294901760
    %604 = vmatpush.msra.mxu0 %v603
    %v605 = vand.u32 %v52, 4294901760
    %606 = vmatpush.msra.mxu0 %v605
    %v607 = vand.u32 %v51, 4294901760
    %608 = vmatpush.msra.mxu0 %v607
    %v609 = vand.u32 %v50, 4294901760
    %610 = vmatpush.msra.mxu0 %v609
    %v611 = vand.u32 %v49, 4294901760
    %612 = vmatpush.msra.mxu0 %v611
    %v613 = vand.u32 %v48, 4294901760
    %614 = vmatpush.msra.mxu0 %v613
    %v615 = vand.u32 %v47, 4294901760
    %616 = vmatpush.msra.mxu0 %v615
    %v617 = vand.u32 %v46, 4294901760
    %618 = vmatpush.msra.mxu0 %v617
    %v619 = vand.u32 %v45, 4294901760
    %620 = vmatpush.msra.mxu0 %v619
    %v621 = vand.u32 %v44, 4294901760
    %622 = vmatpush.msra.mxu0 %v621
    %v623 = vand.u32 %v43, 4294901760
    %624 = vmatpush.msra.mxu0 %v623
    %v625 = vand.u32 %v42, 4294901760
    %626 = vmatpush.msra.mxu0 %v625
    %v627 = vand.u32 %v25, 4294901760
    %v628 = vsub.f32 %v25, %v627
    %v629 = vand.u32 %v628, 4294901760
    %630 = vmatmul.f32.gmra.mxu0 %v629
    %v631 = vpop.f32.mrf.mxu0
    %v632 = vadd.f32 %v593, %v631
    %633 = vdwg.mxu0
    %v634 = vand.u32 %v57, 4294901760
    %v635 = vsub.f32 %v57, %v634
    %v636 = vand.u32 %v635, 4294901760
    %637 = vmatpush.msra.mxu0 %v636
    %v638 = vand.u32 %v56, 4294901760
    %v639 = vsub.f32 %v56, %v638
    %v640 = vand.u32 %v639, 4294901760
    %641 = vmatpush.msra.mxu0 %v640
    %v642 = vand.u32 %v55, 4294901760
    %v643 = vsub.f32 %v55, %v642
    %v644 = vand.u32 %v643, 4294901760
    %645 = vmatpush.msra.mxu0 %v644
    %v646 = vand.u32 %v54, 4294901760
    %v647 = vsub.f32 %v54, %v646
    %v648 = vand.u32 %v647, 4294901760
    %649 = vmatpush.msra.mxu0 %v648
    %v650 = vand.u32 %v53, 4294901760
    %v651 = vsub.f32 %v53, %v650
    %v652 = vand.u32 %v651, 4294901760
    %653 = vmatpush.msra.mxu0 %v652
    %v654 = vand.u32 %v52, 4294901760
    %v655 = vsub.f32 %v52, %v654
    %v656 = vand.u32 %v655, 4294901760
    %657 = vmatpush.msra.mxu0 %v656
    %v658 = vand.u32 %v51, 4294901760
    %v659 = vsub.f32 %v51, %v658
    %v660 = vand.u32 %v659, 4294901760
    %661 = vmatpush.msra.mxu0 %v660
    %v662 = vand.u32 %v50, 4294901760
    %v663 = vsub.f32 %v50, %v662
    %v664 = vand.u32 %v663, 4294901760
    %665 = vmatpush.msra.mxu0 %v664
    %v666 = vand.u32 %v49, 4294901760
    %v667 = vsub.f32 %v49, %v666
    %v668 = vand.u32 %v667, 4294901760
    %669 = vmatpush.msra.mxu0 %v668
    %v670 = vand.u32 %v48, 4294901760
    %v671 = vsub.f32 %v48, %v670
    %v672 = vand.u32 %v671, 4294901760
    %673 = vmatpush.msra.mxu0 %v672
    %v674 = vand.u32 %v47, 4294901760
    %v675 = vsub.f32 %v47, %v674
    %v676 = vand.u32 %v675, 4294901760
    %677 = vmatpush.msra.mxu0 %v676
    %v678 = vand.u32 %v46, 4294901760
    %v679 = vsub.f32 %v46, %v678
    %v680 = vand.u32 %v679, 4294901760
    %681 = vmatpush.msra.mxu0 %v680
    %v682 = vand.u32 %v45, 4294901760
    %v683 = vsub.f32 %v45, %v682
    %v684 = vand.u32 %v683, 4294901760
    %685 = vmatpush.msra.mxu0 %v684
    %v686 = vand.u32 %v44, 4294901760
    %v687 = vsub.f32 %v44, %v686
    %v688 = vand.u32 %v687, 4294901760
    %689 = vmatpush.msra.mxu0 %v688
    %v690 = vand.u32 %v43, 4294901760
    %v691 = vsub.f32 %v43, %v690
    %v692 = vand.u32 %v691, 4294901760
    %693 = vmatpush.msra.mxu0 %v692
    %v694 = vand.u32 %v42, 4294901760
    %v695 = vsub.f32 %v42, %v694
    %v696 = vand.u32 %v695, 4294901760
    %697 = vmatpush.msra.mxu0 %v696
    %v698 = vand.u32 %v25, 4294901760
    %699 = vmatmul.f32.gmra.mxu0 %v698
    %v700 = vpop.f32.mrf.mxu0
    %v701 = vadd.f32 %v632, %v700
    %702 = vdwg.mxu0
    %v703 = vand.u32 %v57, 4294901760
    %704 = vmatpush.msra.mxu0 %v703
    %v705 = vand.u32 %v56, 4294901760
    %706 = vmatpush.msra.mxu0 %v705
    %v707 = vand.u32 %v55, 4294901760
    %708 = vmatpush.msra.mxu0 %v707
    %v709 = vand.u32 %v54, 4294901760
    %710 = vmatpush.msra.mxu0 %v709
    %v711 = vand.u32 %v53, 4294901760
    %712 = vmatpush.msra.mxu0 %v711
    %v713 = vand.u32 %v52, 4294901760
    %714 = vmatpush.msra.mxu0 %v713
    %v715 = vand.u32 %v51, 4294901760
    %716 = vmatpush.msra.mxu0 %v715
    %v717 = vand.u32 %v50, 4294901760
    %718 = vmatpush.msra.mxu0 %v717
    %v719 = vand.u32 %v49, 4294901760
    %720 = vmatpush.msra.mxu0 %v719
    %v721 = vand.u32 %v48, 4294901760
    %722 = vmatpush.msra.mxu0 %v721
    %v723 = vand.u32 %v47, 4294901760
    %724 = vmatpush.msra.mxu0 %v723
    %v725 = vand.u32 %v46, 4294901760
    %726 = vmatpush.msra.mxu0 %v725
    %v727 = vand.u32 %v45, 4294901760
    %728 = vmatpush.msra.mxu0 %v727
    %v729 = vand.u32 %v44, 4294901760
    %730 = vmatpush.msra.mxu0 %v729
    %v731 = vand.u32 %v43, 4294901760
    %732 = vmatpush.msra.mxu0 %v731
    %v733 = vand.u32 %v42, 4294901760
    %734 = vmatpush.msra.mxu0 %v733
    %v735 = vand.u32 %v25, 4294901760
    %736 = vmatmul.f32.gmra.mxu0 %v735
    %v737 = vpop.f32.mrf.mxu0
    %v738 = vadd.f32 %v701, %v737
    %739 = vdwg.mxu0
    %v740 = vld [vmem:[%s2] sm:$0xff]
    %v741 = vld [vmem:[%s2 + $0x8] sm:$0xff]
    %v742 = vld [vmem:[%s2 + $0x10] sm:$0xff]
    %v743 = vld [vmem:[%s2 + $0x18] sm:$0xff]
    %v744 = vld [vmem:[%s2 + $0x20] sm:$0xff]
    %v745 = vld [vmem:[%s2 + $0x28] sm:$0xff]
    %v746 = vld [vmem:[%s2 + $0x30] sm:$0xff]
    %v747 = vld [vmem:[%s2 + $0x38] sm:$0xff]
    %vm748 = vcmask 64512
    %v750 = vsel %vm748, %v740, 0
    %v753 = vsel %vm748, %v741, 0
    %v756 = vsel %vm748, %v742, 0
    %v759 = vsel %vm748, %v743, 0
    %v762 = vsel %vm748, %v744, 0
    %v765 = vsel %vm748, %v745, 0
    %v768 = vsel %vm748, %v746, 0
    %v771 = vsel %vm748, %v747, 0
    %773 = vmatpush.msra.mxu0 0.0
    %774 = vmatpush.msra.mxu0 0.0
    %775 = vmatpush.msra.mxu0 0.0
    %776 = vmatpush.msra.mxu0 0.0
    %777 = vmatpush.msra.mxu0 0.0
    %778 = vmatpush.msra.mxu0 0.0
    %779 = vmatpush.msra.mxu0 0.0
    %780 = vmatpush.msra.mxu0 0.0
    %781 = vmatpush.msra.mxu0 0.0
    %782 = vmatpush.msra.mxu0 0.0
    %783 = vmatpush.msra.mxu0 0.0
    %784 = vmatpush.msra.mxu0 0.0
    %785 = vmatpush.msra.mxu0 0.0
    %786 = vmatpush.msra.mxu0 0.0
    %787 = vmatpush.msra.mxu0 0.0
    %v788 = vand.u32 %v738, 4294901760
    %789 = vmatpush.msra.mxu0 %v788
    %v790 = vand.u32 %v750, 4294901760
    %v791 = vsub.f32 %v750, %v790
    %v792 = vand.u32 %v791, 4294901760
    %v793 = vsub.f32 %v791, %v792
    %v794 = vand.u32 %v793, 4294901760
    %795 = vmatmul.f32.gmra.mxu0 %v794
    %v796 = vpop.f32.mrf.mxu0
    %v797 = vadd.f32 0.0, %v796
    %v798 = vand.u32 %v753, 4294901760
    %v799 = vsub.f32 %v753, %v798
    %v800 = vand.u32 %v799, 4294901760
    %v801 = vsub.f32 %v799, %v800
    %v802 = vand.u32 %v801, 4294901760
    %803 = vmatmul.f32.gmra.mxu0 %v802
    %v804 = vpop.f32.mrf.mxu0
    %v805 = vadd.f32 0.0, %v804
    %v806 = vand.u32 %v756, 4294901760
    %v807 = vsub.f32 %v756, %v806
    %v808 = vand.u32 %v807, 4294901760
    %v809 = vsub.f32 %v807, %v808
    %v810 = vand.u32 %v809, 4294901760
    %811 = vmatmul.f32.gmra.mxu0 %v810
    %v812 = vpop.f32.mrf.mxu0
    %v813 = vadd.f32 0.0, %v812
    %v814 = vand.u32 %v759, 4294901760
    %v815 = vsub.f32 %v759, %v814
    %v816 = vand.u32 %v815, 4294901760
    %v817 = vsub.f32 %v815, %v816
    %v818 = vand.u32 %v817, 4294901760
    %819 = vmatmul.f32.gmra.mxu0 %v818
    %v820 = vpop.f32.mrf.mxu0
    %v821 = vadd.f32 0.0, %v820
    %v822 = vand.u32 %v762, 4294901760
    %v823 = vsub.f32 %v762, %v822
    %v824 = vand.u32 %v823, 4294901760
    %v825 = vsub.f32 %v823, %v824
    %v826 = vand.u32 %v825, 4294901760
    %827 = vmatmul.f32.gmra.mxu0 %v826
    %v828 = vpop.f32.mrf.mxu0
    %v829 = vadd.f32 0.0, %v828
    %v830 = vand.u32 %v765, 4294901760
    %v831 = vsub.f32 %v765, %v830
    %v832 = vand.u32 %v831, 4294901760
    %v833 = vsub.f32 %v831, %v832
    %v834 = vand.u32 %v833, 4294901760
    %835 = vmatmul.f32.gmra.mxu0 %v834
    %v836 = vpop.f32.mrf.mxu0
    %v837 = vadd.f32 0.0, %v836
    %v838 = vand.u32 %v768, 4294901760
    %v839 = vsub.f32 %v768, %v838
    %v840 = vand.u32 %v839, 4294901760
    %v841 = vsub.f32 %v839, %v840
    %v842 = vand.u32 %v841, 4294901760
    %843 = vmatmul.f32.gmra.mxu0 %v842
    %v844 = vpop.f32.mrf.mxu0
    %v845 = vadd.f32 0.0, %v844
    %v846 = vand.u32 %v771, 4294901760
    %v847 = vsub.f32 %v771, %v846
    %v848 = vand.u32 %v847, 4294901760
    %v849 = vsub.f32 %v847, %v848
    %v850 = vand.u32 %v849, 4294901760
    %851 = vmatmul.f32.gmra.mxu0 %v850
    %v852 = vpop.f32.mrf.mxu0
    %v853 = vadd.f32 0.0, %v852
    %854 = vdwg.mxu0
    %855 = vmatpush.msra.mxu0 0.0
    %856 = vmatpush.msra.mxu0 0.0
    %857 = vmatpush.msra.mxu0 0.0
    %858 = vmatpush.msra.mxu0 0.0
    %859 = vmatpush.msra.mxu0 0.0
    %860 = vmatpush.msra.mxu0 0.0
    %861 = vmatpush.msra.mxu0 0.0
    %862 = vmatpush.msra.mxu0 0.0
    %863 = vmatpush.msra.mxu0 0.0
    %864 = vmatpush.msra.mxu0 0.0
    %865 = vmatpush.msra.mxu0 0.0
    %866 = vmatpush.msra.mxu0 0.0
    %867 = vmatpush.msra.mxu0 0.0
    %868 = vmatpush.msra.mxu0 0.0
    %869 = vmatpush.msra.mxu0 0.0
    %v870 = vand.u32 %v738, 4294901760
    %v871 = vsub.f32 %v738, %v870
    %v872 = vand.u32 %v871, 4294901760
    %v873 = vsub.f32 %v871, %v872
    %v874 = vand.u32 %v873, 4294901760
    %875 = vmatpush.msra.mxu0 %v874
    %v876 = vand.u32 %v750, 4294901760
    %877 = vmatmul.f32.gmra.mxu0 %v876
    %v878 = vpop.f32.mrf.mxu0
    %v879 = vadd.f32 %v797, %v878
    %v880 = vand.u32 %v753, 4294901760
    %881 = vmatmul.f32.gmra.mxu0 %v880
    %v882 = vpop.f32.mrf.mxu0
    %v883 = vadd.f32 %v805, %v882
    %v884 = vand.u32 %v756, 4294901760
    %885 = vmatmul.f32.gmra.mxu0 %v884
    %v886 = vpop.f32.mrf.mxu0
    %v887 = vadd.f32 %v813, %v886
    %v888 = vand.u32 %v759, 4294901760
    %889 = vmatmul.f32.gmra.mxu0 %v888
    %v890 = vpop.f32.mrf.mxu0
    %v891 = vadd.f32 %v821, %v890
    %v892 = vand.u32 %v762, 4294901760
    %893 = vmatmul.f32.gmra.mxu0 %v892
    %v894 = vpop.f32.mrf.mxu0
    %v895 = vadd.f32 %v829, %v894
    %v896 = vand.u32 %v765, 4294901760
    %897 = vmatmul.f32.gmra.mxu0 %v896
    %v898 = vpop.f32.mrf.mxu0
    %v899 = vadd.f32 %v837, %v898
    %v900 = vand.u32 %v768, 4294901760
    %901 = vmatmul.f32.gmra.mxu0 %v900
    %v902 = vpop.f32.mrf.mxu0
    %v903 = vadd.f32 %v845, %v902
    %v904 = vand.u32 %v771, 4294901760
    %905 = vmatmul.f32.gmra.mxu0 %v904
    %v906 = vpop.f32.mrf.mxu0
    %v907 = vadd.f32 %v853, %v906
    %908 = vdwg.mxu0
    %909 = vmatpush.msra.mxu0 0.0
    %910 = vmatpush.msra.mxu0 0.0
    %911 = vmatpush.msra.mxu0 0.0
    %912 = vmatpush.msra.mxu0 0.0
    %913 = vmatpush.msra.mxu0 0.0
    %914 = vmatpush.msra.mxu0 0.0
    %915 = vmatpush.msra.mxu0 0.0
    %916 = vmatpush.msra.mxu0 0.0
    %917 = vmatpush.msra.mxu0 0.0
    %918 = vmatpush.msra.mxu0 0.0
    %919 = vmatpush.msra.mxu0 0.0
    %920 = vmatpush.msra.mxu0 0.0
    %921 = vmatpush.msra.mxu0 0.0
    %922 = vmatpush.msra.mxu0 0.0
    %923 = vmatpush.msra.mxu0 0.0
    %v924 = vand.u32 %v738, 4294901760
    %v925 = vsub.f32 %v738, %v924
    %926 = vmatpush.msra.mxu0 %v925
    %v927 = vand.u32 %v750, 4294901760
    %v928 = vsub.f32 %v750, %v927
    %929 = vmatmul.f32.gmra.mxu0 %v928
    %v930 = vpop.f32.mrf.mxu0
    %v931 = vadd.f32 %v879, %v930
    %v932 = vand.u32 %v753, 4294901760
    %v933 = vsub.f32 %v753, %v932
    %934 = vmatmul.f32.gmra.mxu0 %v933
    %v935 = vpop.f32.mrf.mxu0
    %v936 = vadd.f32 %v883, %v935
    %v937 = vand.u32 %v756, 4294901760
    %v938 = vsub.f32 %v756, %v937
    %939 = vmatmul.f32.gmra.mxu0 %v938
    %v940 = vpop.f32.mrf.mxu0
    %v941 = vadd.f32 %v887, %v940
    %v942 = vand.u32 %v759, 4294901760
    %v943 = vsub.f32 %v759, %v942
    %944 = vmatmul.f32.gmra.mxu0 %v943
    %v945 = vpop.f32.mrf.mxu0
    %v946 = vadd.f32 %v891, %v945
    %v947 = vand.u32 %v762, 4294901760
    %v948 = vsub.f32 %v762, %v947
    %949 = vmatmul.f32.gmra.mxu0 %v948
    %v950 = vpop.f32.mrf.mxu0
    %v951 = vadd.f32 %v895, %v950
    %v952 = vand.u32 %v765, 4294901760
    %v953 = vsub.f32 %v765, %v952
    %954 = vmatmul.f32.gmra.mxu0 %v953
    %v955 = vpop.f32.mrf.mxu0
    %v956 = vadd.f32 %v899, %v955
    %v957 = vand.u32 %v768, 4294901760
    %v958 = vsub.f32 %v768, %v957
    %959 = vmatmul.f32.gmra.mxu0 %v958
    %v960 = vpop.f32.mrf.mxu0
    %v961 = vadd.f32 %v903, %v960
    %v962 = vand.u32 %v771, 4294901760
    %v963 = vsub.f32 %v771, %v962
    %964 = vmatmul.f32.gmra.mxu0 %v963
    %v965 = vpop.f32.mrf.mxu0
    %v966 = vadd.f32 %v907, %v965
    %967 = vdwg.mxu0
    %968 = vmatpush.msra.mxu0 0.0
    %969 = vmatpush.msra.mxu0 0.0
    %970 = vmatpush.msra.mxu0 0.0
    %971 = vmatpush.msra.mxu0 0.0
    %972 = vmatpush.msra.mxu0 0.0
    %973 = vmatpush.msra.mxu0 0.0
    %974 = vmatpush.msra.mxu0 0.0
    %975 = vmatpush.msra.mxu0 0.0
    %976 = vmatpush.msra.mxu0 0.0
    %977 = vmatpush.msra.mxu0 0.0
    %978 = vmatpush.msra.mxu0 0.0
    %979 = vmatpush.msra.mxu0 0.0
    %980 = vmatpush.msra.mxu0 0.0
    %981 = vmatpush.msra.mxu0 0.0
    %982 = vmatpush.msra.mxu0 0.0
    %v983 = vand.u32 %v738, 4294901760
    %984 = vmatpush.msra.mxu0 %v983
    %v985 = vand.u32 %v750, 4294901760
    %v986 = vsub.f32 %v750, %v985
    %v987 = vand.u32 %v986, 4294901760
    %988 = vmatmul.f32.gmra.mxu0 %v987
    %v989 = vpop.f32.mrf.mxu0
    %v990 = vadd.f32 %v931, %v989
    %v991 = vand.u32 %v753, 4294901760
    %v992 = vsub.f32 %v753, %v991
    %v993 = vand.u32 %v992, 4294901760
    %994 = vmatmul.f32.gmra.mxu0 %v993
    %v995 = vpop.f32.mrf.mxu0
    %v996 = vadd.f32 %v936, %v995
    %v997 = vand.u32 %v756, 4294901760
    %v998 = vsub.f32 %v756, %v997
    %v999 = vand.u32 %v998, 4294901760
    %1000 = vmatmul.f32.gmra.mxu0 %v999
    %v1001 = vpop.f32.mrf.mxu0
    %v1002 = vadd.f32 %v941, %v1001
    %v1003 = vand.u32 %v759, 4294901760
    %v1004 = vsub.f32 %v759, %v1003
    %v1005 = vand.u32 %v1004, 4294901760
    %1006 = vmatmul.f32.gmra.mxu0 %v1005
    %v1007 = vpop.f32.mrf.mxu0
    %v1008 = vadd.f32 %v946, %v1007
    %v1009 = vand.u32 %v762, 4294901760
    %v1010 = vsub.f32 %v762, %v1009
    %v1011 = vand.u32 %v1010, 4294901760
    %1012 = vmatmul.f32.gmra.mxu0 %v1011
    %v1013 = vpop.f32.mrf.mxu0
    %v1014 = vadd.f32 %v951, %v1013
    %v1015 = vand.u32 %v765, 4294901760
    %v1016 = vsub.f32 %v765, %v1015
    %v1017 = vand.u32 %v1016, 4294901760
    %1018 = vmatmul.f32.gmra.mxu0 %v1017
    %v1019 = vpop.f32.mrf.mxu0
    %v1020 = vadd.f32 %v956, %v1019
    %v1021 = vand.u32 %v768, 4294901760
    %v1022 = vsub.f32 %v768, %v1021
    %v1023 = vand.u32 %v1022, 4294901760
    %1024 = vmatmul.f32.gmra.mxu0 %v1023
    %v1025 = vpop.f32.mrf.mxu0
    %v1026 = vadd.f32 %v961, %v1025
    %v1027 = vand.u32 %v771, 4294901760
    %v1028 = vsub.f32 %v771, %v1027
    %v1029 = vand.u32 %v1028, 4294901760
    %1030 = vmatmul.f32.gmra.mxu0 %v1029
    %v1031 = vpop.f32.mrf.mxu0
    %v1032 = vadd.f32 %v966, %v1031
    %1033 = vdwg.mxu0
    %1034 = vmatpush.msra.mxu0 0.0
    %1035 = vmatpush.msra.mxu0 0.0
    %1036 = vmatpush.msra.mxu0 0.0
    %1037 = vmatpush.msra.mxu0 0.0
    %1038 = vmatpush.msra.mxu0 0.0
    %1039 = vmatpush.msra.mxu0 0.0
    %1040 = vmatpush.msra.mxu0 0.0
    %1041 = vmatpush.msra.mxu0 0.0
    %1042 = vmatpush.msra.mxu0 0.0
    %1043 = vmatpush.msra.mxu0 0.0
    %1044 = vmatpush.msra.mxu0 0.0
    %1045 = vmatpush.msra.mxu0 0.0
    %1046 = vmatpush.msra.mxu0 0.0
    %1047 = vmatpush.msra.mxu0 0.0
    %1048 = vmatpush.msra.mxu0 0.0
    %v1049 = vand.u32 %v738, 4294901760
    %v1050 = vsub.f32 %v738, %v1049
    %v1051 = vand.u32 %v1050, 4294901760
    %1052 = vmatpush.msra.mxu0 %v1051
    %v1053 = vand.u32 %v750, 4294901760
    %1054 = vmatmul.f32.gmra.mxu0 %v1053
    %v1055 = vpop.f32.mrf.mxu0
    %v1056 = vadd.f32 %v990, %v1055
    %v1057 = vand.u32 %v753, 4294901760
    %1058 = vmatmul.f32.gmra.mxu0 %v1057
    %v1059 = vpop.f32.mrf.mxu0
    %v1060 = vadd.f32 %v996, %v1059
    %v1061 = vand.u32 %v756, 4294901760
    %1062 = vmatmul.f32.gmra.mxu0 %v1061
    %v1063 = vpop.f32.mrf.mxu0
    %v1064 = vadd.f32 %v1002, %v1063
    %v1065 = vand.u32 %v759, 4294901760
    %1066 = vmatmul.f32.gmra.mxu0 %v1065
    %v1067 = vpop.f32.mrf.mxu0
    %v1068 = vadd.f32 %v1008, %v1067
    %v1069 = vand.u32 %v762, 4294901760
    %1070 = vmatmul.f32.gmra.mxu0 %v1069
    %v1071 = vpop.f32.mrf.mxu0
    %v1072 = vadd.f32 %v1014, %v1071
    %v1073 = vand.u32 %v765, 4294901760
    %1074 = vmatmul.f32.gmra.mxu0 %v1073
    %v1075 = vpop.f32.mrf.mxu0
    %v1076 = vadd.f32 %v1020, %v1075
    %v1077 = vand.u32 %v768, 4294901760
    %1078 = vmatmul.f32.gmra.mxu0 %v1077
    %v1079 = vpop.f32.mrf.mxu0
    %v1080 = vadd.f32 %v1026, %v1079
    %v1081 = vand.u32 %v771, 4294901760
    %1082 = vmatmul.f32.gmra.mxu0 %v1081
    %v1083 = vpop.f32.mrf.mxu0
    %v1084 = vadd.f32 %v1032, %v1083
    %1085 = vdwg.mxu0
    %1086 = vmatpush.msra.mxu0 0.0
    %1087 = vmatpush.msra.mxu0 0.0
    %1088 = vmatpush.msra.mxu0 0.0
    %1089 = vmatpush.msra.mxu0 0.0
    %1090 = vmatpush.msra.mxu0 0.0
    %1091 = vmatpush.msra.mxu0 0.0
    %1092 = vmatpush.msra.mxu0 0.0
    %1093 = vmatpush.msra.mxu0 0.0
    %1094 = vmatpush.msra.mxu0 0.0
    %1095 = vmatpush.msra.mxu0 0.0
    %1096 = vmatpush.msra.mxu0 0.0
    %1097 = vmatpush.msra.mxu0 0.0
    %1098 = vmatpush.msra.mxu0 0.0
    %1099 = vmatpush.msra.mxu0 0.0
    %1100 = vmatpush.msra.mxu0 0.0
    %v1101 = vand.u32 %v738, 4294901760
    %1102 = vmatpush.msra.mxu0 %v1101
    %v1103 = vand.u32 %v750, 4294901760
    %1104 = vmatmul.f32.gmra.mxu0 %v1103
    %v1105 = vpop.f32.mrf.mxu0
    %v1106 = vadd.f32 %v1056, %v1105
    %v1107 = vand.u32 %v753, 4294901760
    %1108 = vmatmul.f32.gmra.mxu0 %v1107
    %v1109 = vpop.f32.mrf.mxu0
    %v1110 = vadd.f32 %v1060, %v1109
    %v1111 = vand.u32 %v756, 4294901760
    %1112 = vmatmul.f32.gmra.mxu0 %v1111
    %v1113 = vpop.f32.mrf.mxu0
    %v1114 = vadd.f32 %v1064, %v1113
    %v1115 = vand.u32 %v759, 4294901760
    %1116 = vmatmul.f32.gmra.mxu0 %v1115
    %v1117 = vpop.f32.mrf.mxu0
    %v1118 = vadd.f32 %v1068, %v1117
    %v1119 = vand.u32 %v762, 4294901760
    %1120 = vmatmul.f32.gmra.mxu0 %v1119
    %v1121 = vpop.f32.mrf.mxu0
    %v1122 = vadd.f32 %v1072, %v1121
    %v1123 = vand.u32 %v765, 4294901760
    %1124 = vmatmul.f32.gmra.mxu0 %v1123
    %v1125 = vpop.f32.mrf.mxu0
    %v1126 = vadd.f32 %v1076, %v1125
    %v1127 = vand.u32 %v768, 4294901760
    %1128 = vmatmul.f32.gmra.mxu0 %v1127
    %v1129 = vpop.f32.mrf.mxu0
    %v1130 = vadd.f32 %v1080, %v1129
    %v1131 = vand.u32 %v771, 4294901760
    %1132 = vmatmul.f32.gmra.mxu0 %v1131
    %v1133 = vpop.f32.mrf.mxu0
    %v1134 = vadd.f32 %v1084, %v1133
    %1135 = vdwg.mxu0
    %v1136 = vld [vmem:[%s3] sm:$0xff]
    %v1137 = vld [vmem:[%s3 + $0x8] sm:$0xff]
    %v1138 = vld [vmem:[%s3 + $0x10] sm:$0xff]
    %v1139 = vld [vmem:[%s3 + $0x18] sm:$0xff]
    %v1140 = vld [vmem:[%s3 + $0x20] sm:$0xff]
    %v1141 = vld [vmem:[%s3 + $0x28] sm:$0xff]
    %v1142 = vld [vmem:[%s3 + $0x30] sm:$0xff]
    %v1143 = vld [vmem:[%s3 + $0x38] sm:$0xff]
    %v1144 = vmul.f32 %v1106, %v1136
    %v1145 = vmul.f32 %v1110, %v1137
    %v1146 = vmul.f32 %v1114, %v1138
    %v1147 = vmul.f32 %v1118, %v1139
    %v1148 = vmul.f32 %v1122, %v1140
    %v1149 = vmul.f32 %v1126, %v1141
    %v1150 = vmul.f32 %v1130, %v1142
    %v1151 = vmul.f32 %v1134, %v1143
    %v1152 = vld [vmem:[%s4] sm:$0xff]
    %v1153 = vld [vmem:[%s4 + $0x8] sm:$0xff]
    %v1154 = vld [vmem:[%s4 + $0x10] sm:$0xff]
    %v1155 = vld [vmem:[%s4 + $0x18] sm:$0xff]
    %v1156 = vld [vmem:[%s4 + $0x20] sm:$0xff]
    %v1157 = vld [vmem:[%s4 + $0x28] sm:$0xff]
    %v1158 = vld [vmem:[%s4 + $0x30] sm:$0xff]
    %v1159 = vld [vmem:[%s4 + $0x38] sm:$0xff]
    %v1160 = vadd.f32 %v1144, %v1152
    %v1161 = vadd.f32 %v1145, %v1153
    %v1162 = vadd.f32 %v1146, %v1154
    %v1163 = vadd.f32 %v1147, %v1155
    %v1164 = vadd.f32 %v1148, %v1156
    %v1165 = vadd.f32 %v1149, %v1157
    %v1166 = vadd.f32 %v1150, %v1158
    %v1167 = vadd.f32 %v1151, %v1159
    %v1168 = vmax.f32 %v1160, 0.0
    %v1169 = vmax.f32 %v1161, 0.0
    %v1170 = vmax.f32 %v1162, 0.0
    %v1171 = vmax.f32 %v1163, 0.0
    %v1172 = vmax.f32 %v1164, 0.0
    %v1173 = vmax.f32 %v1165, 0.0
    %v1174 = vmax.f32 %v1166, 0.0
    %v1175 = vmax.f32 %v1167, 0.0
    %v1176 = vld [vmem:[%s5] sm:$0xff]
    %v1177 = vld [vmem:[%s5 + $0x8] sm:$0xff]
    %v1178 = vld [vmem:[%s5 + $0x10] sm:$0xff]
    %v1179 = vld [vmem:[%s5 + $0x18] sm:$0xff]
    %v1180 = vld [vmem:[%s5 + $0x20] sm:$0xff]
    %v1181 = vld [vmem:[%s5 + $0x28] sm:$0xff]
    %v1182 = vld [vmem:[%s5 + $0x30] sm:$0xff]
    %v1183 = vld [vmem:[%s5 + $0x38] sm:$0xff]
    %v1184 = vld [vmem:[%s5 + $0x40] sm:$0xff]
    %v1185 = vld [vmem:[%s5 + $0x48] sm:$0xff]
    %v1186 = vld [vmem:[%s5 + $0x50] sm:$0xff]
    %v1187 = vld [vmem:[%s5 + $0x58] sm:$0xff]
    %v1188 = vld [vmem:[%s5 + $0x60] sm:$0xff]
    %v1189 = vld [vmem:[%s5 + $0x68] sm:$0xff]
    %v1190 = vld [vmem:[%s5 + $0x70] sm:$0xff]
    %v1191 = vld [vmem:[%s5 + $0x78] sm:$0xff]
    %vm1192 = vcmask 523264
    %v1194 = vsel %vm1192, %v1168, 0
    %v1197 = vsel %vm1192, %v1169, 0
    %v1200 = vsel %vm1192, %v1170, 0
    %v1203 = vsel %vm1192, %v1171, 0
    %v1206 = vsel %vm1192, %v1172, 0
    %v1209 = vsel %vm1192, %v1173, 0
    %v1212 = vsel %vm1192, %v1174, 0
    %v1215 = vsel %vm1192, %v1175, 0
    %1217 = vmatpush.msra.mxu0 0.0
    %1218 = vmatpush.msra.mxu0 0.0
    %1219 = vmatpush.msra.mxu0 0.0
    %1220 = vmatpush.msra.mxu0 0.0
    %1221 = vmatpush.msra.mxu0 0.0
    %1222 = vmatpush.msra.mxu0 0.0
    %1223 = vmatpush.msra.mxu0 0.0
    %1224 = vmatpush.msra.mxu0 0.0
    %v1225 = vand.u32 %v1190, 4294901760
    %1226 = vmatpush.msra.mxu0 %v1225
    %v1227 = vand.u32 %v1188, 4294901760
    %1228 = vmatpush.msra.mxu0 %v1227
    %v1229 = vand.u32 %v1186, 4294901760
    %1230 = vmatpush.msra.mxu0 %v1229
    %v1231 = vand.u32 %v1184, 4294901760
    %1232 = vmatpush.msra.mxu0 %v1231
    %v1233 = vand.u32 %v1182, 4294901760
    %1234 = vmatpush.msra.mxu0 %v1233
    %v1235 = vand.u32 %v1180, 4294901760
    %1236 = vmatpush.msra.mxu0 %v1235
    %v1237 = vand.u32 %v1178, 4294901760
    %1238 = vmatpush.msra.mxu0 %v1237
    %v1239 = vand.u32 %v1176, 4294901760
    %1240 = vmatpush.msra.mxu0 %v1239
    %v1241 = vand.u32 %v1194, 4294901760
    %v1242 = vsub.f32 %v1194, %v1241
    %v1243 = vand.u32 %v1242, 4294901760
    %v1244 = vsub.f32 %v1242, %v1243
    %v1245 = vand.u32 %v1244, 4294901760
    %1246 = vmatmul.f32.gmra.mxu0 %v1245
    %v1247 = vpop.f32.mrf.mxu0
    %v1248 = vadd.f32 0.0, %v1247
    %v1249 = vand.u32 %v1197, 4294901760
    %v1250 = vsub.f32 %v1197, %v1249
    %v1251 = vand.u32 %v1250, 4294901760
    %v1252 = vsub.f32 %v1250, %v1251
    %v1253 = vand.u32 %v1252, 4294901760
    %1254 = vmatmul.f32.gmra.mxu0 %v1253
    %v1255 = vpop.f32.mrf.mxu0
    %v1256 = vadd.f32 0.0, %v1255
    %v1257 = vand.u32 %v1200, 4294901760
    %v1258 = vsub.f32 %v1200, %v1257
    %v1259 = vand.u32 %v1258, 4294901760
    %v1260 = vsub.f32 %v1258, %v1259
    %v1261 = vand.u32 %v1260, 4294901760
    %1262 = vmatmul.f32.gmra.mxu0 %v1261
    %v1263 = vpop.f32.mrf.mxu0
    %v1264 = vadd.f32 0.0, %v1263
    %v1265 = vand.u32 %v1203, 4294901760
    %v1266 = vsub.f32 %v1203, %v1265
    %v1267 = vand.u32 %v1266, 4294901760
    %v1268 = vsub.f32 %v1266, %v1267
    %v1269 = vand.u32 %v1268, 4294901760
    %1270 = vmatmul.f32.gmra.mxu0 %v1269
    %v1271 = vpop.f32.mrf.mxu0
    %v1272 = vadd.f32 0.0, %v1271
    %v1273 = vand.u32 %v1206, 4294901760
    %v1274 = vsub.f32 %v1206, %v1273
    %v1275 = vand.u32 %v1274, 4294901760
    %v1276 = vsub.f32 %v1274, %v1275
    %v1277 = vand.u32 %v1276, 4294901760
    %1278 = vmatmul.f32.gmra.mxu0 %v1277
    %v1279 = vpop.f32.mrf.mxu0
    %v1280 = vadd.f32 0.0, %v1279
    %v1281 = vand.u32 %v1209, 4294901760
    %v1282 = vsub.f32 %v1209, %v1281
    %v1283 = vand.u32 %v1282, 4294901760
    %v1284 = vsub.f32 %v1282, %v1283
    %v1285 = vand.u32 %v1284, 4294901760
    %1286 = vmatmul.f32.gmra.mxu0 %v1285
    %v1287 = vpop.f32.mrf.mxu0
    %v1288 = vadd.f32 0.0, %v1287
    %v1289 = vand.u32 %v1212, 4294901760
    %v1290 = vsub.f32 %v1212, %v1289
    %v1291 = vand.u32 %v1290, 4294901760
    %v1292 = vsub.f32 %v1290, %v1291
    %v1293 = vand.u32 %v1292, 4294901760
    %1294 = vmatmul.f32.gmra.mxu0 %v1293
    %v1295 = vpop.f32.mrf.mxu0
    %v1296 = vadd.f32 0.0, %v1295
    %v1297 = vand.u32 %v1215, 4294901760
    %v1298 = vsub.f32 %v1215, %v1297
    %v1299 = vand.u32 %v1298, 4294901760
    %v1300 = vsub.f32 %v1298, %v1299
    %v1301 = vand.u32 %v1300, 4294901760
    %1302 = vmatmul.f32.gmra.mxu0 %v1301
    %v1303 = vpop.f32.mrf.mxu0
    %v1304 = vadd.f32 0.0, %v1303
    %1305 = vdwg.mxu0
    %1306 = vmatpush.msra.mxu0 0.0
    %1307 = vmatpush.msra.mxu0 0.0
    %1308 = vmatpush.msra.mxu0 0.0
    %1309 = vmatpush.msra.mxu0 0.0
    %1310 = vmatpush.msra.mxu0 0.0
    %1311 = vmatpush.msra.mxu0 0.0
    %1312 = vmatpush.msra.mxu0 0.0
    %1313 = vmatpush.msra.mxu0 0.0
    %v1314 = vand.u32 %v1190, 4294901760
    %v1315 = vsub.f32 %v1190, %v1314
    %v1316 = vand.u32 %v1315, 4294901760
    %v1317 = vsub.f32 %v1315, %v1316
    %v1318 = vand.u32 %v1317, 4294901760
    %1319 = vmatpush.msra.mxu0 %v1318
    %v1320 = vand.u32 %v1188, 4294901760
    %v1321 = vsub.f32 %v1188, %v1320
    %v1322 = vand.u32 %v1321, 4294901760
    %v1323 = vsub.f32 %v1321, %v1322
    %v1324 = vand.u32 %v1323, 4294901760
    %1325 = vmatpush.msra.mxu0 %v1324
    %v1326 = vand.u32 %v1186, 4294901760
    %v1327 = vsub.f32 %v1186, %v1326
    %v1328 = vand.u32 %v1327, 4294901760
    %v1329 = vsub.f32 %v1327, %v1328
    %v1330 = vand.u32 %v1329, 4294901760
    %1331 = vmatpush.msra.mxu0 %v1330
    %v1332 = vand.u32 %v1184, 4294901760
    %v1333 = vsub.f32 %v1184, %v1332
    %v1334 = vand.u32 %v1333, 4294901760
    %v1335 = vsub.f32 %v1333, %v1334
    %v1336 = vand.u32 %v1335, 4294901760
    %1337 = vmatpush.msra.mxu0 %v1336
    %v1338 = vand.u32 %v1182, 4294901760
    %v1339 = vsub.f32 %v1182, %v1338
    %v1340 = vand.u32 %v1339, 4294901760
    %v1341 = vsub.f32 %v1339, %v1340
    %v1342 = vand.u32 %v1341, 4294901760
    %1343 = vmatpush.msra.mxu0 %v1342
    %v1344 = vand.u32 %v1180, 4294901760
    %v1345 = vsub.f32 %v1180, %v1344
    %v1346 = vand.u32 %v1345, 4294901760
    %v1347 = vsub.f32 %v1345, %v1346
    %v1348 = vand.u32 %v1347, 4294901760
    %1349 = vmatpush.msra.mxu0 %v1348
    %v1350 = vand.u32 %v1178, 4294901760
    %v1351 = vsub.f32 %v1178, %v1350
    %v1352 = vand.u32 %v1351, 4294901760
    %v1353 = vsub.f32 %v1351, %v1352
    %v1354 = vand.u32 %v1353, 4294901760
    %1355 = vmatpush.msra.mxu0 %v1354
    %v1356 = vand.u32 %v1176, 4294901760
    %v1357 = vsub.f32 %v1176, %v1356
    %v1358 = vand.u32 %v1357, 4294901760
    %v1359 = vsub.f32 %v1357, %v1358
    %v1360 = vand.u32 %v1359, 4294901760
    %1361 = vmatpush.msra.mxu0 %v1360
    %v1362 = vand.u32 %v1194, 4294901760
    %1363 = vmatmul.f32.gmra.mxu0 %v1362
    %v1364 = vpop.f32.mrf.mxu0
    %v1365 = vadd.f32 %v1248, %v1364
    %v1366 = vand.u32 %v1197, 4294901760
    %1367 = vmatmul.f32.gmra.mxu0 %v1366
    %v1368 = vpop.f32.mrf.mxu0
    %v1369 = vadd.f32 %v1256, %v1368
    %v1370 = vand.u32 %v1200, 4294901760
    %1371 = vmatmul.f32.gmra.mxu0 %v1370
    %v1372 = vpop.f32.mrf.mxu0
    %v1373 = vadd.f32 %v1264, %v1372
    %v1374 = vand.u32 %v1203, 4294901760
    %1375 = vmatmul.f32.gmra.mxu0 %v1374
    %v1376 = vpop.f32.mrf.mxu0
    %v1377 = vadd.f32 %v1272, %v1376
    %v1378 = vand.u32 %v1206, 4294901760
    %1379 = vmatmul.f32.gmra.mxu0 %v1378
    %v1380 = vpop.f32.mrf.mxu0
    %v1381 = vadd.f32 %v1280, %v1380
    %v1382 = vand.u32 %v1209, 4294901760
    %1383 = vmatmul.f32.gmra.mxu0 %v1382
    %v1384 = vpop.f32.mrf.mxu0
    %v1385 = vadd.f32 %v1288, %v1384
    %v1386 = vand.u32 %v1212, 4294901760
    %1387 = vmatmul.f32.gmra.mxu0 %v1386
    %v1388 = vpop.f32.mrf.mxu0
    %v1389 = vadd.f32 %v1296, %v1388
    %v1390 = vand.u32 %v1215, 4294901760
    %1391 = vmatmul.f32.gmra.mxu0 %v1390
    %v1392 = vpop.f32.mrf.mxu0
    %v1393 = vadd.f32 %v1304, %v1392
    %1394 = vdwg.mxu0
    %1395 = vmatpush.msra.mxu0 0.0
    %1396 = vmatpush.msra.mxu0 0.0
    %1397 = vmatpush.msra.mxu0 0.0
    %1398 = vmatpush.msra.mxu0 0.0
    %1399 = vmatpush.msra.mxu0 0.0
    %1400 = vmatpush.msra.mxu0 0.0
    %1401 = vmatpush.msra.mxu0 0.0
    %1402 = vmatpush.msra.mxu0 0.0
    %v1403 = vand.u32 %v1190, 4294901760
    %v1404 = vsub.f32 %v1190, %v1403
    %1405 = vmatpush.msra.mxu0 %v1404
    %v1406 = vand.u32 %v1188, 4294901760
    %v1407 = vsub.f32 %v1188, %v1406
    %1408 = vmatpush.msra.mxu0 %v1407
    %v1409 = vand.u32 %v1186, 4294901760
    %v1410 = vsub.f32 %v1186, %v1409
    %1411 = vmatpush.msra.mxu0 %v1410
    %v1412 = vand.u32 %v1184, 4294901760
    %v1413 = vsub.f32 %v1184, %v1412
    %1414 = vmatpush.msra.mxu0 %v1413
    %v1415 = vand.u32 %v1182, 4294901760
    %v1416 = vsub.f32 %v1182, %v1415
    %1417 = vmatpush.msra.mxu0 %v1416
    %v1418 = vand.u32 %v1180, 4294901760
    %v1419 = vsub.f32 %v1180, %v1418
    %1420 = vmatpush.msra.mxu0 %v1419
    %v1421 = vand.u32 %v1178, 4294901760
    %v1422 = vsub.f32 %v1178, %v1421
    %1423 = vmatpush.msra.mxu0 %v1422
    %v1424 = vand.u32 %v1176, 4294901760
    %v1425 = vsub.f32 %v1176, %v1424
    %1426 = vmatpush.msra.mxu0 %v1425
    %v1427 = vand.u32 %v1194, 4294901760
    %v1428 = vsub.f32 %v1194, %v1427
    %1429 = vmatmul.f32.gmra.mxu0 %v1428
    %v1430 = vpop.f32.mrf.mxu0
    %v1431 = vadd.f32 %v1365, %v1430
    %v1432 = vand.u32 %v1197, 4294901760
    %v1433 = vsub.f32 %v1197, %v1432
    %1434 = vmatmul.f32.gmra.mxu0 %v1433
    %v1435 = vpop.f32.mrf.mxu0
    %v1436 = vadd.f32 %v1369, %v1435
    %v1437 = vand.u32 %v1200, 4294901760
    %v1438 = vsub.f32 %v1200, %v1437
    %1439 = vmatmul.f32.gmra.mxu0 %v1438
    %v1440 = vpop.f32.mrf.mxu0
    %v1441 = vadd.f32 %v1373, %v1440
    %v1442 = vand.u32 %v1203, 4294901760
    %v1443 = vsub.f32 %v1203, %v1442
    %1444 = vmatmul.f32.gmra.mxu0 %v1443
    %v1445 = vpop.f32.mrf.mxu0
    %v1446 = vadd.f32 %v1377, %v1445
    %v1447 = vand.u32 %v1206, 4294901760
    %v1448 = vsub.f32 %v1206, %v1447
    %1449 = vmatmul.f32.gmra.mxu0 %v1448
    %v1450 = vpop.f32.mrf.mxu0
    %v1451 = vadd.f32 %v1381, %v1450
    %v1452 = vand.u32 %v1209, 4294901760
    %v1453 = vsub.f32 %v1209, %v1452
    %1454 = vmatmul.f32.gmra.mxu0 %v1453
    %v1455 = vpop.f32.mrf.mxu0
    %v1456 = vadd.f32 %v1385, %v1455
    %v1457 = vand.u32 %v1212, 4294901760
    %v1458 = vsub.f32 %v1212, %v1457
    %1459 = vmatmul.f32.gmra.mxu0 %v1458
    %v1460 = vpop.f32.mrf.mxu0
    %v1461 = vadd.f32 %v1389, %v1460
    %v1462 = vand.u32 %v1215, 4294901760
    %v1463 = vsub.f32 %v1215, %v1462
    %1464 = vmatmul.f32.gmra.mxu0 %v1463
    %v1465 = vpop.f32.mrf.mxu0
    %v1466 = vadd.f32 %v1393, %v1465
    %1467 = vdwg.mxu0
    %1468 = vmatpush.msra.mxu0 0.0
    %1469 = vmatpush.msra.mxu0 0.0
    %1470 = vmatpush.msra.mxu0 0.0
    %1471 = vmatpush.msra.mxu0 0.0
    %1472 = vmatpush.msra.mxu0 0.0
    %1473 = vmatpush.msra.mxu0 0.0
    %1474 = vmatpush.msra.mxu0 0.0
    %1475 = vmatpush.msra.mxu0 0.0
    %v1476 = vand.u32 %v1190, 4294901760
    %1477 = vmatpush.msra.mxu0 %v1476
    %v1478 = vand.u32 %v1188, 4294901760
    %1479 = vmatpush.msra.mxu0 %v1478
    %v1480 = vand.u32 %v1186, 4294901760
    %1481 = vmatpush.msra.mxu0 %v1480
    %v1482 = vand.u32 %v1184, 4294901760
    %1483 = vmatpush.msra.mxu0 %v1482
    %v1484 = vand.u32 %v1182, 4294901760
    %1485 = vmatpush.msra.mxu0 %v1484
    %v1486 = vand.u32 %v1180, 4294901760
    %1487 = vmatpush.msra.mxu0 %v1486
    %v1488 = vand.u32 %v1178, 4294901760
    %1489 = vmatpush.msra.mxu0 %v1488
    %v1490 = vand.u32 %v1176, 4294901760
    %1491 = vmatpush.msra.mxu0 %v1490
    %v1492 = vand.u32 %v1194, 4294901760
    %v1493 = vsub.f32 %v1194, %v1492
    %v1494 = vand.u32 %v1493, 4294901760
    %1495 = vmatmul.f32.gmra.mxu0 %v1494
    %v1496 = vpop.f32.mrf.mxu0
    %v1497 = vadd.f32 %v1431, %v1496
    %v1498 = vand.u32 %v1197, 4294901760
    %v1499 = vsub.f32 %v1197, %v1498
    %v1500 = vand.u32 %v1499, 4294901760
    %1501 = vmatmul.f32.gmra.mxu0 %v1500
    %v1502 = vpop.f32.mrf.mxu0
    %v1503 = vadd.f32 %v1436, %v1502
    %v1504 = vand.u32 %v1200, 4294901760
    %v1505 = vsub.f32 %v1200, %v1504
    %v1506 = vand.u32 %v1505, 4294901760
    %1507 = vmatmul.f32.gmra.mxu0 %v1506
    %v1508 = vpop.f32.mrf.mxu0
    %v1509 = vadd.f32 %v1441, %v1508
    %v1510 = vand.u32 %v1203, 4294901760
    %v1511 = vsub.f32 %v1203, %v1510
    %v1512 = vand.u32 %v1511, 4294901760
    %1513 = vmatmul.f32.gmra.mxu0 %v1512
    %v1514 = vpop.f32.mrf.mxu0
    %v1515 = vadd.f32 %v1446, %v1514
    %v1516 = vand.u32 %v1206, 4294901760
    %v1517 = vsub.f32 %v1206, %v1516
    %v1518 = vand.u32 %v1517, 4294901760
    %1519 = vmatmul.f32.gmra.mxu0 %v1518
    %v1520 = vpop.f32.mrf.mxu0
    %v1521 = vadd.f32 %v1451, %v1520
    %v1522 = vand.u32 %v1209, 4294901760
    %v1523 = vsub.f32 %v1209, %v1522
    %v1524 = vand.u32 %v1523, 4294901760
    %1525 = vmatmul.f32.gmra.mxu0 %v1524
    %v1526 = vpop.f32.mrf.mxu0
    %v1527 = vadd.f32 %v1456, %v1526
    %v1528 = vand.u32 %v1212, 4294901760
    %v1529 = vsub.f32 %v1212, %v1528
    %v1530 = vand.u32 %v1529, 4294901760
    %1531 = vmatmul.f32.gmra.mxu0 %v1530
    %v1532 = vpop.f32.mrf.mxu0
    %v1533 = vadd.f32 %v1461, %v1532
    %v1534 = vand.u32 %v1215, 4294901760
    %v1535 = vsub.f32 %v1215, %v1534
    %v1536 = vand.u32 %v1535, 4294901760
    %1537 = vmatmul.f32.gmra.mxu0 %v1536
    %v1538 = vpop.f32.mrf.mxu0
    %v1539 = vadd.f32 %v1466, %v1538
    %1540 = vdwg.mxu0
    %1541 = vmatpush.msra.mxu0 0.0
    %1542 = vmatpush.msra.mxu0 0.0
    %1543 = vmatpush.msra.mxu0 0.0
    %1544 = vmatpush.msra.mxu0 0.0
    %1545 = vmatpush.msra.mxu0 0.0
    %1546 = vmatpush.msra.mxu0 0.0
    %1547 = vmatpush.msra.mxu0 0.0
    %1548 = vmatpush.msra.mxu0 0.0
    %v1549 = vand.u32 %v1190, 4294901760
    %v1550 = vsub.f32 %v1190, %v1549
    %v1551 = vand.u32 %v1550, 4294901760
    %1552 = vmatpush.msra.mxu0 %v1551
    %v1553 = vand.u32 %v1188, 4294901760
    %v1554 = vsub.f32 %v1188, %v1553
    %v1555 = vand.u32 %v1554, 4294901760
    %1556 = vmatpush.msra.mxu0 %v1555
    %v1557 = vand.u32 %v1186, 4294901760
    %v1558 = vsub.f32 %v1186, %v1557
    %v1559 = vand.u32 %v1558, 4294901760
    %1560 = vmatpush.msra.mxu0 %v1559
    %v1561 = vand.u32 %v1184, 4294901760
    %v1562 = vsub.f32 %v1184, %v1561
    %v1563 = vand.u32 %v1562, 4294901760
    %1564 = vmatpush.msra.mxu0 %v1563
    %v1565 = vand.u32 %v1182, 4294901760
    %v1566 = vsub.f32 %v1182, %v1565
    %v1567 = vand.u32 %v1566, 4294901760
    %1568 = vmatpush.msra.mxu0 %v1567
    %v1569 = vand.u32 %v1180, 4294901760
    %v1570 = vsub.f32 %v1180, %v1569
    %v1571 = vand.u32 %v1570, 4294901760
    %1572 = vmatpush.msra.mxu0 %v1571
    %v1573 = vand.u32 %v1178, 4294901760
    %v1574 = vsub.f32 %v1178, %v1573
    %v1575 = vand.u32 %v1574, 4294901760
    %1576 = vmatpush.msra.mxu0 %v1575
    %v1577 = vand.u32 %v1176, 4294901760
    %v1578 = vsub.f32 %v1176, %v1577
    %v1579 = vand.u32 %v1578, 4294901760
    %1580 = vmatpush.msra.mxu0 %v1579
    %v1581 = vand.u32 %v1194, 4294901760
    %1582 = vmatmul.f32.gmra.mxu0 %v1581
    %v1583 = vpop.f32.mrf.mxu0
    %v1584 = vadd.f32 %v1497, %v1583
    %v1585 = vand.u32 %v1197, 4294901760
    %1586 = vmatmul.f32.gmra.mxu0 %v1585
    %v1587 = vpop.f32.mrf.mxu0
    %v1588 = vadd.f32 %v1503, %v1587
    %v1589 = vand.u32 %v1200, 4294901760
    %1590 = vmatmul.f32.gmra.mxu0 %v1589
    %v1591 = vpop.f32.mrf.mxu0
    %v1592 = vadd.f32 %v1509, %v1591
    %v1593 = vand.u32 %v1203, 4294901760
    %1594 = vmatmul.f32.gmra.mxu0 %v1593
    %v1595 = vpop.f32.mrf.mxu0
    %v1596 = vadd.f32 %v1515, %v1595
    %v1597 = vand.u32 %v1206, 4294901760
    %1598 = vmatmul.f32.gmra.mxu0 %v1597
    %v1599 = vpop.f32.mrf.mxu0
    %v1600 = vadd.f32 %v1521, %v1599
    %v1601 = vand.u32 %v1209, 4294901760
    %1602 = vmatmul.f32.gmra.mxu0 %v1601
    %v1603 = vpop.f32.mrf.mxu0
    %v1604 = vadd.f32 %v1527, %v1603
    %v1605 = vand.u32 %v1212, 4294901760
    %1606 = vmatmul.f32.gmra.mxu0 %v1605
    %v1607 = vpop.f32.mrf.mxu0
    %v1608 = vadd.f32 %v1533, %v1607
    %v1609 = vand.u32 %v1215, 4294901760
    %1610 = vmatmul.f32.gmra.mxu0 %v1609
    %v1611 = vpop.f32.mrf.mxu0
    %v1612 = vadd.f32 %v1539, %v1611
    %1613 = vdwg.mxu0
    %1614 = vmatpush.msra.mxu0 0.0
    %1615 = vmatpush.msra.mxu0 0.0
    %1616 = vmatpush.msra.mxu0 0.0
    %1617 = vmatpush.msra.mxu0 0.0
    %1618 = vmatpush.msra.mxu0 0.0
    %1619 = vmatpush.msra.mxu0 0.0
    %1620 = vmatpush.msra.mxu0 0.0
    %1621 = vmatpush.msra.mxu0 0.0
    %v1622 = vand.u32 %v1190, 4294901760
    %1623 = vmatpush.msra.mxu0 %v1622
    %v1624 = vand.u32 %v1188, 4294901760
    %1625 = vmatpush.msra.mxu0 %v1624
    %v1626 = vand.u32 %v1186, 4294901760
    %1627 = vmatpush.msra.mxu0 %v1626
    %v1628 = vand.u32 %v1184, 4294901760
    %1629 = vmatpush.msra.mxu0 %v1628
    %v1630 = vand.u32 %v1182, 4294901760
    %1631 = vmatpush.msra.mxu0 %v1630
    %v1632 = vand.u32 %v1180, 4294901760
    %1633 = vmatpush.msra.mxu0 %v1632
    %v1634 = vand.u32 %v1178, 4294901760
    %1635 = vmatpush.msra.mxu0 %v1634
    %v1636 = vand.u32 %v1176, 4294901760
    %1637 = vmatpush.msra.mxu0 %v1636
    %v1638 = vand.u32 %v1194, 4294901760
    %1639 = vmatmul.f32.gmra.mxu0 %v1638
    %v1640 = vpop.f32.mrf.mxu0
    %v1641 = vadd.f32 %v1584, %v1640
    %v1642 = vand.u32 %v1197, 4294901760
    %1643 = vmatmul.f32.gmra.mxu0 %v1642
    %v1644 = vpop.f32.mrf.mxu0
    %v1645 = vadd.f32 %v1588, %v1644
    %v1646 = vand.u32 %v1200, 4294901760
    %1647 = vmatmul.f32.gmra.mxu0 %v1646
    %v1648 = vpop.f32.mrf.mxu0
    %v1649 = vadd.f32 %v1592, %v1648
    %v1650 = vand.u32 %v1203, 4294901760
    %1651 = vmatmul.f32.gmra.mxu0 %v1650
    %v1652 = vpop.f32.mrf.mxu0
    %v1653 = vadd.f32 %v1596, %v1652
    %v1654 = vand.u32 %v1206, 4294901760
    %1655 = vmatmul.f32.gmra.mxu0 %v1654
    %v1656 = vpop.f32.mrf.mxu0
    %v1657 = vadd.f32 %v1600, %v1656
    %v1658 = vand.u32 %v1209, 4294901760
    %1659 = vmatmul.f32.gmra.mxu0 %v1658
    %v1660 = vpop.f32.mrf.mxu0
    %v1661 = vadd.f32 %v1604, %v1660
    %v1662 = vand.u32 %v1212, 4294901760
    %1663 = vmatmul.f32.gmra.mxu0 %v1662
    %v1664 = vpop.f32.mrf.mxu0
    %v1665 = vadd.f32 %v1608, %v1664
    %v1666 = vand.u32 %v1215, 4294901760
    %1667 = vmatmul.f32.gmra.mxu0 %v1666
    %v1668 = vpop.f32.mrf.mxu0
    %v1669 = vadd.f32 %v1612, %v1668
    %1670 = vdwg.mxu0
    %1671 = vmatpush.msra.mxu0 0.0
    %1672 = vmatpush.msra.mxu0 0.0
    %1673 = vmatpush.msra.mxu0 0.0
    %1674 = vmatpush.msra.mxu0 0.0
    %1675 = vmatpush.msra.mxu0 0.0
    %1676 = vmatpush.msra.mxu0 0.0
    %1677 = vmatpush.msra.mxu0 0.0
    %1678 = vmatpush.msra.mxu0 0.0
    %v1679 = vand.u32 %v1191, 4294901760
    %1680 = vmatpush.msra.mxu0 %v1679
    %v1681 = vand.u32 %v1189, 4294901760
    %1682 = vmatpush.msra.mxu0 %v1681
    %v1683 = vand.u32 %v1187, 4294901760
    %1684 = vmatpush.msra.mxu0 %v1683
    %v1685 = vand.u32 %v1185, 4294901760
    %1686 = vmatpush.msra.mxu0 %v1685
    %v1687 = vand.u32 %v1183, 4294901760
    %1688 = vmatpush.msra.mxu0 %v1687
    %v1689 = vand.u32 %v1181, 4294901760
    %1690 = vmatpush.msra.mxu0 %v1689
    %v1691 = vand.u32 %v1179, 4294901760
    %1692 = vmatpush.msra.mxu0 %v1691
    %v1693 = vand.u32 %v1177, 4294901760
    %1694 = vmatpush.msra.mxu0 %v1693
    %v1695 = vand.u32 %v1194, 4294901760
    %v1696 = vsub.f32 %v1194, %v1695
    %v1697 = vand.u32 %v1696, 4294901760
    %v1698 = vsub.f32 %v1696, %v1697
    %v1699 = vand.u32 %v1698, 4294901760
    %1700 = vmatmul.f32.gmra.mxu0 %v1699
    %v1701 = vpop.f32.mrf.mxu0
    %v1702 = vadd.f32 0.0, %v1701
    %v1703 = vand.u32 %v1197, 4294901760
    %v1704 = vsub.f32 %v1197, %v1703
    %v1705 = vand.u32 %v1704, 4294901760
    %v1706 = vsub.f32 %v1704, %v1705
    %v1707 = vand.u32 %v1706, 4294901760
    %1708 = vmatmul.f32.gmra.mxu0 %v1707
    %v1709 = vpop.f32.mrf.mxu0
    %v1710 = vadd.f32 0.0, %v1709
    %v1711 = vand.u32 %v1200, 4294901760
    %v1712 = vsub.f32 %v1200, %v1711
    %v1713 = vand.u32 %v1712, 4294901760
    %v1714 = vsub.f32 %v1712, %v1713
    %v1715 = vand.u32 %v1714, 4294901760
    %1716 = vmatmul.f32.gmra.mxu0 %v1715
    %v1717 = vpop.f32.mrf.mxu0
    %v1718 = vadd.f32 0.0, %v1717
    %v1719 = vand.u32 %v1203, 4294901760
    %v1720 = vsub.f32 %v1203, %v1719
    %v1721 = vand.u32 %v1720, 4294901760
    %v1722 = vsub.f32 %v1720, %v1721
    %v1723 = vand.u32 %v1722, 4294901760
    %1724 = vmatmul.f32.gmra.mxu0 %v1723
    %v1725 = vpop.f32.mrf.mxu0
    %v1726 = vadd.f32 0.0, %v1725
    %v1727 = vand.u32 %v1206, 4294901760
    %v1728 = vsub.f32 %v1206, %v1727
    %v1729 = vand.u32 %v1728, 4294901760
    %v1730 = vsub.f32 %v1728, %v1729
    %v1731 = vand.u32 %v1730, 4294901760
    %1732 = vmatmul.f32.gmra.mxu0 %v1731
    %v1733 = vpop.f32.mrf.mxu0
    %v1734 = vadd.f32 0.0, %v1733
    %v1735 = vand.u32 %v1209, 4294901760
    %v1736 = vsub.f32 %v1209, %v1735
    %v1737 = vand.u32 %v1736, 4294901760
    %v1738 = vsub.f32 %v1736, %v1737
    %v1739 = vand.u32 %v1738, 4294901760
    %1740 = vmatmul.f32.gmra.mxu0 %v1739
    %v1741 = vpop.f32.mrf.mxu0
    %v1742 = vadd.f32 0.0, %v1741
    %v1743 = vand.u32 %v1212, 4294901760
    %v1744 = vsub.f32 %v1212, %v1743
    %v1745 = vand.u32 %v1744, 4294901760
    %v1746 = vsub.f32 %v1744, %v1745
    %v1747 = vand.u32 %v1746, 4294901760
    %1748 = vmatmul.f32.gmra.mxu0 %v1747
    %v1749 = vpop.f32.mrf.mxu0
    %v1750 = vadd.f32 0.0, %v1749
    %v1751 = vand.u32 %v1215, 4294901760
    %v1752 = vsub.f32 %v1215, %v1751
    %v1753 = vand.u32 %v1752, 4294901760
    %v1754 = vsub.f32 %v1752, %v1753
    %v1755 = vand.u32 %v1754, 4294901760
    %1756 = vmatmul.f32.gmra.mxu0 %v1755
    %v1757 = vpop.f32.mrf.mxu0
    %v1758 = vadd.f32 0.0, %v1757
    %1759 = vdwg.mxu0
    %1760 = vmatpush.msra.mxu0 0.0
    %1761 = vmatpush.msra.mxu0 0.0
    %1762 = vmatpush.msra.mxu0 0.0
    %1763 = vmatpush.msra.mxu0 0.0
    %1764 = vmatpush.msra.mxu0 0.0
    %1765 = vmatpush.msra.mxu0 0.0
    %1766 = vmatpush.msra.mxu0 0.0
    %1767 = vmatpush.msra.mxu0 0.0
    %v1768 = vand.u32 %v1191, 4294901760
    %v1769 = vsub.f32 %v1191, %v1768
    %v1770 = vand.u32 %v1769, 4294901760
    %v1771 = vsub.f32 %v1769, %v1770
    %v1772 = vand.u32 %v1771, 4294901760
    %1773 = vmatpush.msra.mxu0 %v1772
    %v1774 = vand.u32 %v1189, 4294901760
    %v1775 = vsub.f32 %v1189, %v1774
    %v1776 = vand.u32 %v1775, 4294901760
    %v1777 = vsub.f32 %v1775, %v1776
    %v1778 = vand.u32 %v1777, 4294901760
    %1779 = vmatpush.msra.mxu0 %v1778
    %v1780 = vand.u32 %v1187, 4294901760
    %v1781 = vsub.f32 %v1187, %v1780
    %v1782 = vand.u32 %v1781, 4294901760
    %v1783 = vsub.f32 %v1781, %v1782
    %v1784 = vand.u32 %v1783, 4294901760
    %1785 = vmatpush.msra.mxu0 %v1784
    %v1786 = vand.u32 %v1185, 4294901760
    %v1787 = vsub.f32 %v1185, %v1786
    %v1788 = vand.u32 %v1787, 4294901760
    %v1789 = vsub.f32 %v1787, %v1788
    %v1790 = vand.u32 %v1789, 4294901760
    %1791 = vmatpush.msra.mxu0 %v1790
    %v1792 = vand.u32 %v1183, 4294901760
    %v1793 = vsub.f32 %v1183, %v1792
    %v1794 = vand.u32 %v1793, 4294901760
    %v1795 = vsub.f32 %v1793, %v1794
    %v1796 = vand.u32 %v1795, 4294901760
    %1797 = vmatpush.msra.mxu0 %v1796
    %v1798 = vand.u32 %v1181, 4294901760
    %v1799 = vsub.f32 %v1181, %v1798
    %v1800 = vand.u32 %v1799, 4294901760
    %v1801 = vsub.f32 %v1799, %v1800
    %v1802 = vand.u32 %v1801, 4294901760
    %1803 = vmatpush.msra.mxu0 %v1802
    %v1804 = vand.u32 %v1179, 4294901760
    %v1805 = vsub.f32 %v1179, %v1804
    %v1806 = vand.u32 %v1805, 4294901760
    %v1807 = vsub.f32 %v1805, %v1806
    %v1808 = vand.u32 %v1807, 4294901760
    %1809 = vmatpush.msra.mxu0 %v1808
    %v1810 = vand.u32 %v1177, 4294901760
    %v1811 = vsub.f32 %v1177, %v1810
    %v1812 = vand.u32 %v1811, 4294901760
    %v1813 = vsub.f32 %v1811, %v1812
    %v1814 = vand.u32 %v1813, 4294901760
    %1815 = vmatpush.msra.mxu0 %v1814
    %v1816 = vand.u32 %v1194, 4294901760
    %1817 = vmatmul.f32.gmra.mxu0 %v1816
    %v1818 = vpop.f32.mrf.mxu0
    %v1819 = vadd.f32 %v1702, %v1818
    %v1820 = vand.u32 %v1197, 4294901760
    %1821 = vmatmul.f32.gmra.mxu0 %v1820
    %v1822 = vpop.f32.mrf.mxu0
    %v1823 = vadd.f32 %v1710, %v1822
    %v1824 = vand.u32 %v1200, 4294901760
    %1825 = vmatmul.f32.gmra.mxu0 %v1824
    %v1826 = vpop.f32.mrf.mxu0
    %v1827 = vadd.f32 %v1718, %v1826
    %v1828 = vand.u32 %v1203, 4294901760
    %1829 = vmatmul.f32.gmra.mxu0 %v1828
    %v1830 = vpop.f32.mrf.mxu0
    %v1831 = vadd.f32 %v1726, %v1830
    %v1832 = vand.u32 %v1206, 4294901760
    %1833 = vmatmul.f32.gmra.mxu0 %v1832
    %v1834 = vpop.f32.mrf.mxu0
    %v1835 = vadd.f32 %v1734, %v1834
    %v1836 = vand.u32 %v1209, 4294901760
    %1837 = vmatmul.f32.gmra.mxu0 %v1836
    %v1838 = vpop.f32.mrf.mxu0
    %v1839 = vadd.f32 %v1742, %v1838
    %v1840 = vand.u32 %v1212, 4294901760
    %1841 = vmatmul.f32.gmra.mxu0 %v1840
    %v1842 = vpop.f32.mrf.mxu0
    %v1843 = vadd.f32 %v1750, %v1842
    %v1844 = vand.u32 %v1215, 4294901760
    %1845 = vmatmul.f32.gmra.mxu0 %v1844
    %v1846 = vpop.f32.mrf.mxu0
    %v1847 = vadd.f32 %v1758, %v1846
    %1848 = vdwg.mxu0
    %1849 = vmatpush.msra.mxu0 0.0
    %1850 = vmatpush.msra.mxu0 0.0
    %1851 = vmatpush.msra.mxu0 0.0
    %1852 = vmatpush.msra.mxu0 0.0
    %1853 = vmatpush.msra.mxu0 0.0
    %1854 = vmatpush.msra.mxu0 0.0
    %1855 = vmatpush.msra.mxu0 0.0
    %1856 = vmatpush.msra.mxu0 0.0
    %v1857 = vand.u32 %v1191, 4294901760
    %v1858 = vsub.f32 %v1191, %v1857
    %1859 = vmatpush.msra.mxu0 %v1858
    %v1860 = vand.u32 %v1189, 4294901760
    %v1861 = vsub.f32 %v1189, %v1860
    %1862 = vmatpush.msra.mxu0 %v1861
    %v1863 = vand.u32 %v1187, 4294901760
    %v1864 = vsub.f32 %v1187, %v1863
    %1865 = vmatpush.msra.mxu0 %v1864
    %v1866 = vand.u32 %v1185, 4294901760
    %v1867 = vsub.f32 %v1185, %v1866
    %1868 = vmatpush.msra.mxu0 %v1867
    %v1869 = vand.u32 %v1183, 4294901760
    %v1870 = vsub.f32 %v1183, %v1869
    %1871 = vmatpush.msra.mxu0 %v1870
    %v1872 = vand.u32 %v1181, 4294901760
    %v1873 = vsub.f32 %v1181, %v1872
    %1874 = vmatpush.msra.mxu0 %v1873
    %v1875 = vand.u32 %v1179, 4294901760
    %v1876 = vsub.f32 %v1179, %v1875
    %1877 = vmatpush.msra.mxu0 %v1876
    %v1878 = vand.u32 %v1177, 4294901760
    %v1879 = vsub.f32 %v1177, %v1878
    %1880 = vmatpush.msra.mxu0 %v1879
    %v1881 = vand.u32 %v1194, 4294901760
    %v1882 = vsub.f32 %v1194, %v1881
    %1883 = vmatmul.f32.gmra.mxu0 %v1882
    %v1884 = vpop.f32.mrf.mxu0
    %v1885 = vadd.f32 %v1819, %v1884
    %v1886 = vand.u32 %v1197, 4294901760
    %v1887 = vsub.f32 %v1197, %v1886
    %1888 = vmatmul.f32.gmra.mxu0 %v1887
    %v1889 = vpop.f32.mrf.mxu0
    %v1890 = vadd.f32 %v1823, %v1889
    %v1891 = vand.u32 %v1200, 4294901760
    %v1892 = vsub.f32 %v1200, %v1891
    %1893 = vmatmul.f32.gmra.mxu0 %v1892
    %v1894 = vpop.f32.mrf.mxu0
    %v1895 = vadd.f32 %v1827, %v1894
    %v1896 = vand.u32 %v1203, 4294901760
    %v1897 = vsub.f32 %v1203, %v1896
    %1898 = vmatmul.f32.gmra.mxu0 %v1897
    %v1899 = vpop.f32.mrf.mxu0
    %v1900 = vadd.f32 %v1831, %v1899
    %v1901 = vand.u32 %v1206, 4294901760
    %v1902 = vsub.f32 %v1206, %v1901
    %1903 = vmatmul.f32.gmra.mxu0 %v1902
    %v1904 = vpop.f32.mrf.mxu0
    %v1905 = vadd.f32 %v1835, %v1904
    %v1906 = vand.u32 %v1209, 4294901760
    %v1907 = vsub.f32 %v1209, %v1906
    %1908 = vmatmul.f32.gmra.mxu0 %v1907
    %v1909 = vpop.f32.mrf.mxu0
    %v1910 = vadd.f32 %v1839, %v1909
    %v1911 = vand.u32 %v1212, 4294901760
    %v1912 = vsub.f32 %v1212, %v1911
    %1913 = vmatmul.f32.gmra.mxu0 %v1912
    %v1914 = vpop.f32.mrf.mxu0
    %v1915 = vadd.f32 %v1843, %v1914
    %v1916 = vand.u32 %v1215, 4294901760
    %v1917 = vsub.f32 %v1215, %v1916
    %1918 = vmatmul.f32.gmra.mxu0 %v1917
    %v1919 = vpop.f32.mrf.mxu0
    %v1920 = vadd.f32 %v1847, %v1919
    %1921 = vdwg.mxu0
    %1922 = vmatpush.msra.mxu0 0.0
    %1923 = vmatpush.msra.mxu0 0.0
    %1924 = vmatpush.msra.mxu0 0.0
    %1925 = vmatpush.msra.mxu0 0.0
    %1926 = vmatpush.msra.mxu0 0.0
    %1927 = vmatpush.msra.mxu0 0.0
    %1928 = vmatpush.msra.mxu0 0.0
    %1929 = vmatpush.msra.mxu0 0.0
    %v1930 = vand.u32 %v1191, 4294901760
    %1931 = vmatpush.msra.mxu0 %v1930
    %v1932 = vand.u32 %v1189, 4294901760
    %1933 = vmatpush.msra.mxu0 %v1932
    %v1934 = vand.u32 %v1187, 4294901760
    %1935 = vmatpush.msra.mxu0 %v1934
    %v1936 = vand.u32 %v1185, 4294901760
    %1937 = vmatpush.msra.mxu0 %v1936
    %v1938 = vand.u32 %v1183, 4294901760
    %1939 = vmatpush.msra.mxu0 %v1938
    %v1940 = vand.u32 %v1181, 4294901760
    %1941 = vmatpush.msra.mxu0 %v1940
    %v1942 = vand.u32 %v1179, 4294901760
    %1943 = vmatpush.msra.mxu0 %v1942
    %v1944 = vand.u32 %v1177, 4294901760
    %1945 = vmatpush.msra.mxu0 %v1944
    %v1946 = vand.u32 %v1194, 4294901760
    %v1947 = vsub.f32 %v1194, %v1946
    %v1948 = vand.u32 %v1947, 4294901760
    %1949 = vmatmul.f32.gmra.mxu0 %v1948
    %v1950 = vpop.f32.mrf.mxu0
    %v1951 = vadd.f32 %v1885, %v1950
    %v1952 = vand.u32 %v1197, 4294901760
    %v1953 = vsub.f32 %v1197, %v1952
    %v1954 = vand.u32 %v1953, 4294901760
    %1955 = vmatmul.f32.gmra.mxu0 %v1954
    %v1956 = vpop.f32.mrf.mxu0
    %v1957 = vadd.f32 %v1890, %v1956
    %v1958 = vand.u32 %v1200, 4294901760
    %v1959 = vsub.f32 %v1200, %v1958
    %v1960 = vand.u32 %v1959, 4294901760
    %1961 = vmatmul.f32.gmra.mxu0 %v1960
    %v1962 = vpop.f32.mrf.mxu0
    %v1963 = vadd.f32 %v1895, %v1962
    %v1964 = vand.u32 %v1203, 4294901760
    %v1965 = vsub.f32 %v1203, %v1964
    %v1966 = vand.u32 %v1965, 4294901760
    %1967 = vmatmul.f32.gmra.mxu0 %v1966
    %v1968 = vpop.f32.mrf.mxu0
    %v1969 = vadd.f32 %v1900, %v1968
    %v1970 = vand.u32 %v1206, 4294901760
    %v1971 = vsub.f32 %v1206, %v1970
    %v1972 = vand.u32 %v1971, 4294901760
    %1973 = vmatmul.f32.gmra.mxu0 %v1972
    %v1974 = vpop.f32.mrf.mxu0
    %v1975 = vadd.f32 %v1905, %v1974
    %v1976 = vand.u32 %v1209, 4294901760
    %v1977 = vsub.f32 %v1209, %v1976
    %v1978 = vand.u32 %v1977, 4294901760
    %1979 = vmatmul.f32.gmra.mxu0 %v1978
    %v1980 = vpop.f32.mrf.mxu0
    %v1981 = vadd.f32 %v1910, %v1980
    %v1982 = vand.u32 %v1212, 4294901760
    %v1983 = vsub.f32 %v1212, %v1982
    %v1984 = vand.u32 %v1983, 4294901760
    %1985 = vmatmul.f32.gmra.mxu0 %v1984
    %v1986 = vpop.f32.mrf.mxu0
    %v1987 = vadd.f32 %v1915, %v1986
    %v1988 = vand.u32 %v1215, 4294901760
    %v1989 = vsub.f32 %v1215, %v1988
    %v1990 = vand.u32 %v1989, 4294901760
    %1991 = vmatmul.f32.gmra.mxu0 %v1990
    %v1992 = vpop.f32.mrf.mxu0
    %v1993 = vadd.f32 %v1920, %v1992
    %1994 = vdwg.mxu0
    %1995 = vmatpush.msra.mxu0 0.0
    %1996 = vmatpush.msra.mxu0 0.0
    %1997 = vmatpush.msra.mxu0 0.0
    %1998 = vmatpush.msra.mxu0 0.0
    %1999 = vmatpush.msra.mxu0 0.0
    %2000 = vmatpush.msra.mxu0 0.0
    %2001 = vmatpush.msra.mxu0 0.0
    %2002 = vmatpush.msra.mxu0 0.0
    %v2003 = vand.u32 %v1191, 4294901760
    %v2004 = vsub.f32 %v1191, %v2003
    %v2005 = vand.u32 %v2004, 4294901760
    %2006 = vmatpush.msra.mxu0 %v2005
    %v2007 = vand.u32 %v1189, 4294901760
    %v2008 = vsub.f32 %v1189, %v2007
    %v2009 = vand.u32 %v2008, 4294901760
    %2010 = vmatpush.msra.mxu0 %v2009
    %v2011 = vand.u32 %v1187, 4294901760
    %v2012 = vsub.f32 %v1187, %v2011
    %v2013 = vand.u32 %v2012, 4294901760
    %2014 = vmatpush.msra.mxu0 %v2013
    %v2015 = vand.u32 %v1185, 4294901760
    %v2016 = vsub.f32 %v1185, %v2015
    %v2017 = vand.u32 %v2016, 4294901760
    %2018 = vmatpush.msra.mxu0 %v2017
    %v2019 = vand.u32 %v1183, 4294901760
    %v2020 = vsub.f32 %v1183, %v2019
    %v2021 = vand.u32 %v2020, 4294901760
    %2022 = vmatpush.msra.mxu0 %v2021
    %v2023 = vand.u32 %v1181, 4294901760
    %v2024 = vsub.f32 %v1181, %v2023
    %v2025 = vand.u32 %v2024, 4294901760
    %2026 = vmatpush.msra.mxu0 %v2025
    %v2027 = vand.u32 %v1179, 4294901760
    %v2028 = vsub.f32 %v1179, %v2027
    %v2029 = vand.u32 %v2028, 4294901760
    %2030 = vmatpush.msra.mxu0 %v2029
    %v2031 = vand.u32 %v1177, 4294901760
    %v2032 = vsub.f32 %v1177, %v2031
    %v2033 = vand.u32 %v2032, 4294901760
    %2034 = vmatpush.msra.mxu0 %v2033
    %v2035 = vand.u32 %v1194, 4294901760
    %2036 = vmatmul.f32.gmra.mxu0 %v2035
    %v2037 = vpop.f32.mrf.mxu0
    %v2038 = vadd.f32 %v1951, %v2037
    %v2039 = vand.u32 %v1197, 4294901760
    %2040 = vmatmul.f32.gmra.mxu0 %v2039
    %v2041 = vpop.f32.mrf.mxu0
    %v2042 = vadd.f32 %v1957, %v2041
    %v2043 = vand.u32 %v1200, 4294901760
    %2044 = vmatmul.f32.gmra.mxu0 %v2043
    %v2045 = vpop.f32.mrf.mxu0
    %v2046 = vadd.f32 %v1963, %v2045
    %v2047 = vand.u32 %v1203, 4294901760
    %2048 = vmatmul.f32.gmra.mxu0 %v2047
    %v2049 = vpop.f32.mrf.mxu0
    %v2050 = vadd.f32 %v1969, %v2049
    %v2051 = vand.u32 %v1206, 4294901760
    %2052 = vmatmul.f32.gmra.mxu0 %v2051
    %v2053 = vpop.f32.mrf.mxu0
    %v2054 = vadd.f32 %v1975, %v2053
    %v2055 = vand.u32 %v1209, 4294901760
    %2056 = vmatmul.f32.gmra.mxu0 %v2055
    %v2057 = vpop.f32.mrf.mxu0
    %v2058 = vadd.f32 %v1981, %v2057
    %v2059 = vand.u32 %v1212, 4294901760
    %2060 = vmatmul.f32.gmra.mxu0 %v2059
    %v2061 = vpop.f32.mrf.mxu0
    %v2062 = vadd.f32 %v1987, %v2061
    %v2063 = vand.u32 %v1215, 4294901760
    %2064 = vmatmul.f32.gmra.mxu0 %v2063
    %v2065 = vpop.f32.mrf.mxu0
    %v2066 = vadd.f32 %v1993, %v2065
    %2067 = vdwg.mxu0
    %2068 = vmatpush.msra.mxu0 0.0
    %2069 = vmatpush.msra.mxu0 0.0
    %2070 = vmatpush.msra.mxu0 0.0
    %2071 = vmatpush.msra.mxu0 0.0
    %2072 = vmatpush.msra.mxu0 0.0
    %2073 = vmatpush.msra.mxu0 0.0
    %2074 = vmatpush.msra.mxu0 0.0
    %2075 = vmatpush.msra.mxu0 0.0
    %v2076 = vand.u32 %v1191, 4294901760
    %2077 = vmatpush.msra.mxu0 %v2076
    %v2078 = vand.u32 %v1189, 4294901760
    %2079 = vmatpush.msra.mxu0 %v2078
    %v2080 = vand.u32 %v1187, 4294901760
    %2081 = vmatpush.msra.mxu0 %v2080
    %v2082 = vand.u32 %v1185, 4294901760
    %2083 = vmatpush.msra.mxu0 %v2082
    %v2084 = vand.u32 %v1183, 4294901760
    %2085 = vmatpush.msra.mxu0 %v2084
    %v2086 = vand.u32 %v1181, 4294901760
    %2087 = vmatpush.msra.mxu0 %v2086
    %v2088 = vand.u32 %v1179, 4294901760
    %2089 = vmatpush.msra.mxu0 %v2088
    %v2090 = vand.u32 %v1177, 4294901760
    %2091 = vmatpush.msra.mxu0 %v2090
    %v2092 = vand.u32 %v1194, 4294901760
    %2093 = vmatmul.f32.gmra.mxu0 %v2092
    %v2094 = vpop.f32.mrf.mxu0
    %v2095 = vadd.f32 %v2038, %v2094
    %v2096 = vand.u32 %v1197, 4294901760
    %2097 = vmatmul.f32.gmra.mxu0 %v2096
    %v2098 = vpop.f32.mrf.mxu0
    %v2099 = vadd.f32 %v2042, %v2098
    %v2100 = vand.u32 %v1200, 4294901760
    %2101 = vmatmul.f32.gmra.mxu0 %v2100
    %v2102 = vpop.f32.mrf.mxu0
    %v2103 = vadd.f32 %v2046, %v2102
    %v2104 = vand.u32 %v1203, 4294901760
    %2105 = vmatmul.f32.gmra.mxu0 %v2104
    %v2106 = vpop.f32.mrf.mxu0
    %v2107 = vadd.f32 %v2050, %v2106
    %v2108 = vand.u32 %v1206, 4294901760
    %2109 = vmatmul.f32.gmra.mxu0 %v2108
    %v2110 = vpop.f32.mrf.mxu0
    %v2111 = vadd.f32 %v2054, %v2110
    %v2112 = vand.u32 %v1209, 4294901760
    %2113 = vmatmul.f32.gmra.mxu0 %v2112
    %v2114 = vpop.f32.mrf.mxu0
    %v2115 = vadd.f32 %v2058, %v2114
    %v2116 = vand.u32 %v1212, 4294901760
    %2117 = vmatmul.f32.gmra.mxu0 %v2116
    %v2118 = vpop.f32.mrf.mxu0
    %v2119 = vadd.f32 %v2062, %v2118
    %v2120 = vand.u32 %v1215, 4294901760
    %2121 = vmatmul.f32.gmra.mxu0 %v2120
    %v2122 = vpop.f32.mrf.mxu0
    %v2123 = vadd.f32 %v2066, %v2122
    %2124 = vdwg.mxu0
    %2125 = vst [vmem:[#allocation2] sm:$0xf] %v24
    %2126 = vst [vmem:[#allocation2 + $0x8] sm:$0xf] %v25
    %2127 = vst [vmem:[#allocation2] sm:$0xf0] 0.0
    %2128 = vst [vmem:[#allocation2 + $0x8] sm:$0xf0] 0.0
    %2129 = vst [vmem:[#allocation2 + $0x10] sm:$0xff] %v1641
    %2130 = vst [vmem:[#allocation2 + $0x18] sm:$0xff] %v2095
    %2131 = vst [vmem:[#allocation2 + $0x20] sm:$0xff] %v1645
    %2132 = vst [vmem:[#allocation2 + $0x28] sm:$0xff] %v2099
    %2133 = vst [vmem:[#allocation2 + $0x30] sm:$0xff] %v1649
    %2134 = vst [vmem:[#allocation2 + $0x38] sm:$0xff] %v2103
    %2135 = vst [vmem:[#allocation2 + $0x40] sm:$0xff] %v1653
    %2136 = vst [vmem:[#allocation2 + $0x48] sm:$0xff] %v2107
    %v2139 = vrot.slane %v24, 4
    %v2140 = vrot.slane %v25, 4
    %2143 = vst [vmem:[#allocation2 + $0x50] sm:$0xf] %v2139
    %2144 = vst [vmem:[#allocation2 + $0x58] sm:$0xf] %v2140
    %2145 = vst [vmem:[#allocation2 + $0x50] sm:$0xf0] 0.0
    %2146 = vst [vmem:[#allocation2 + $0x58] sm:$0xf0] 0.0
    %2147 = vst [vmem:[#allocation2 + $0x60] sm:$0xff] %v1657
    %2148 = vst [vmem:[#allocation2 + $0x68] sm:$0xff] %v2111
    %2149 = vst [vmem:[#allocation2 + $0x70] sm:$0xff] %v1661
    %2150 = vst [vmem:[#allocation2 + $0x78] sm:$0xff] %v2115
    %2151 = vst [vmem:[#allocation2 + $0x80] sm:$0xff] %v1665
    %2152 = vst [vmem:[#allocation2 + $0x88] sm:$0xff] %v2119
    %2153 = vst [vmem:[#allocation2 + $0x90] sm:$0xff] %v1669
    %2154 = vst [vmem:[#allocation2 + $0x98] sm:$0xff] %v2123
    // Predicated region
    $region26: #{tpu_custom_call.1} parent=1 // pred_check
      _
    $region27: #{tpu_custom_call.1} parent=1 // pred_check_branch
      %2156 = sbr.rel (0) target = $region29
    $region28: #{tpu_custom_call.1} parent=1 // pred_region
      %2158 = vsyncadd [#allocation3], 0
      %s2159 = sshll.u32 [#allocation2], 4
      %s2160 = int_to_ptr.vmem [resolvable:$true] %s2159
      %s2161 = sshll.u32 %s6, 4
      %s2162 = int_to_ptr.hbm [resolvable:$true] %s2161
      %2167 = dma.vmem_to_hbm [thread:$0]  %s2160, 2560, %s2162, [#allocation3], 256, 256, 16
    $region29: #{tpu_custom_call.1} parent=1 // pred_fallthru
      _
    // Predicated region
    $region30: #{tpu_custom_call.1} parent=1 // pred_check
      _
    $region31: #{tpu_custom_call.1} parent=1 // pred_check_branch
      %2169 = sbr.rel (0) target = $region33
    $region32: #{tpu_custom_call.1} parent=1 // pred_region
      %2171 = dma.done [#allocation3], 2560
    $region33: #{tpu_custom_call.1} parent=1 // pred_fallthru
      _
    %2172 = vsyncpa [#allocation3], 1

</llo_original>
